<compile_context>
chip_gen: v6e
topology: v6e:2x2x1
jax: 0.10.0
libtpu: 0.0.40
codegen_flags: <defaults>
</compile_context>

<pallas_src>
import functools

import jax
import jax.numpy as jnp
from jax import lax
from jax.experimental import pallas as pl
from jax.experimental.pallas import tpu as pltpu


# ---------------------------------------------------------------------------
# Kernel A: lane-packed path (C divides 128). Each VMEM row holds k = 128//C
# original token rows side by side; seg_ref is a (128,128) block-diagonal ones
# matrix so x @ seg broadcasts each 32-lane segment sum back over its lanes.
# ---------------------------------------------------------------------------
def _packed_ln_kernel(x_ref, seg_ref, w_ref, b_ref, o_ref, *, c, eps):
    x = x_ref[...].astype(jnp.float32)            # (T, 128)
    seg = seg_ref[...]                            # (128, 128) f32 block-diag ones
    # Segment sums on the MXU (HIGHEST precision -> full f32, MXU is idle anyway).
    seg_sum = jnp.dot(x, seg,
                      precision=lax.Precision.HIGHEST,
                      preferred_element_type=jnp.float32)
    seg_sumsq = jnp.dot(x * x, seg,
                        precision=lax.Precision.HIGHEST,
                        preferred_element_type=jnp.float32)
    inv_c = jnp.float32(1.0 / c)
    mu = seg_sum * inv_c
    var = seg_sumsq * inv_c - mu * mu             # E[x^2] - mu^2 (population var)
    inv = lax.rsqrt(var + jnp.float32(eps))       # EUP rsqrt (free slot)
    y = (x - mu) * inv * w_ref[...].astype(jnp.float32) + b_ref[...].astype(jnp.float32)
    o_ref[...] = y.astype(o_ref.dtype)


# ---------------------------------------------------------------------------
# Kernel B: generic row-wise path (any C). One pass: sum(x) and sum(x*x).
# ---------------------------------------------------------------------------
def _rowwise_ln_kernel(x_ref, w_ref, b_ref, o_ref, *, eps):
    x = x_ref[...].astype(jnp.float32)            # (T, C)
    inv_c = jnp.float32(1.0 / x.shape[-1])
    mu = jnp.sum(x, axis=-1, keepdims=True) * inv_c
    ex2 = jnp.sum(x * x, axis=-1, keepdims=True) * inv_c
    var = ex2 - mu * mu
    inv = lax.rsqrt(var + jnp.float32(eps))
    y = (x - mu) * inv * w_ref[...].astype(jnp.float32) + b_ref[...].astype(jnp.float32)
    o_ref[...] = y.astype(o_ref.dtype)


def _pick_tile_rows(n_rows, row_bytes, target_block_bytes=2 << 20):
    """Largest multiple-of-8 row tile with block ~target_block_bytes (cap at n_rows)."""
    t = max(8, (target_block_bytes // max(row_bytes, 1)) // 8 * 8)
    return n_rows if n_rows <= t else int(t)


def withbias_layernorm(x, weight, bias, *, eps=1e-5):
    """x: (..., C) channels-last (GLCONet applies it to (B, H*W, C) tokens).
    weight, bias: (C,). Returns same shape/dtype as x."""
    orig_shape = x.shape
    C = orig_shape[-1]
    x2 = x.reshape(-1, C)
    N = x2.shape[0]

    w32 = weight.astype(jnp.float32)
    b32 = bias.astype(jnp.float32)
    itemsize = jnp.dtype(x.dtype).itemsize

    k = (128 // C) if (C <= 128 and 128 % C == 0) else 1

    if k > 1 and N % k == 0:
        # ---- lane-dense packed path -------------------------------------
        M = N // k
        L = k * C  # == 128
        xp = x2.reshape(M, L)                       # free contiguous reshape
        wp = jnp.tile(w32, k).reshape(1, L)
        bp = jnp.tile(b32, k).reshape(1, L)
        idx = jnp.arange(L)
        seg = (idx[:, None] // C == idx[None, :] // C).astype(jnp.float32)

        tile_m = _pick_tile_rows(M, L * itemsize)
        grid = (pl.cdiv(M, tile_m),)

        out = pl.pallas_call(
            functools.partial(_packed_ln_kernel, c=C, eps=eps),
            out_shape=jax.ShapeDtypeStruct((M, L), x.dtype),
            grid_spec=pltpu.PrefetchScalarGridSpec(
                num_scalar_prefetch=0,
                grid=grid,
                in_specs=[
                    pl.BlockSpec((tile_m, L), lambda i: (i, 0)),
                    pl.BlockSpec((L, L), lambda i: (0, 0)),
                    pl.BlockSpec((1, L), lambda i: (0, 0)),
                    pl.BlockSpec((1, L), lambda i: (0, 0)),
                ],
                out_specs=pl.BlockSpec((tile_m, L), lambda i: (i, 0)),
            ),
            compiler_params=pltpu.CompilerParams(
                dimension_semantics=("parallel",),
            ),
        )(xp, seg, wp, bp)
        return out.reshape(orig_shape)

    # ---- generic row-wise path ------------------------------------------
    tile_n = _pick_tile_rows(N, C * itemsize)
    grid = (pl.cdiv(N, tile_n),)
    w2 = w32.reshape(1, C)
    b2 = b32.reshape(1, C)

    out = pl.pallas_call(
        functools.partial(_rowwise_ln_kernel, eps=eps),
        out_shape=jax.ShapeDtypeStruct((N, C), x.dtype),
        grid_spec=pltpu.PrefetchScalarGridSpec(
            num_scalar_prefetch=0,
            grid=grid,
            in_specs=[
                pl.BlockSpec((tile_n, C), lambda i: (i, 0)),
                pl.BlockSpec((1, C), lambda i: (0, 0)),
                pl.BlockSpec((1, C), lambda i: (0, 0)),
            ],
            out_specs=pl.BlockSpec((tile_n, C), lambda i: (i, 0)),
        ),
        compiler_params=pltpu.CompilerParams(
            dimension_semantics=("parallel",),
        ),
    )(x2, w2, b2)
    return out.reshape(orig_shape)


def _reference_layernorm(x, weight, bias, eps=1e-5):
    x = x.astype(jnp.float32)
    mu = jnp.mean(x, axis=-1, keepdims=True)
    var = jnp.mean((x - mu) ** 2, axis=-1, keepdims=True)
    return (x - mu) / jnp.sqrt(var + eps) * weight + bias


if __name__ == "__main__":
    key = jax.random.PRNGKey(0)

    # Shapes consistent with GLCONet usage: tokens (B, H*W, C), B=2, H=W=16, C=32.
    B, H, W, C = 2, 16, 16, 32
    k1, k2, k3, k4 = jax.random.split(key, 4)
    x = jax.random.normal(k1, (B, H * W, C), dtype=jnp.float32)
    weight = 1.0 + 0.1 * jax.random.normal(k2, (C,), dtype=jnp.float32)
    bias = 0.1 * jax.random.normal(k3, (C,), dtype=jnp.float32)

    out = withbias_layernorm(x, weight, bias)
    out = jax.block_until_ready(out)
    ref = _reference_layernorm(x, weight, bias)
    assert out.shape == x.shape
    # HIGHEST-precision f32 matmul keeps error ~1e-6; tolerance leaves margin.
    assert jnp.max(jnp.abs(out - ref)) < 1e-3, "packed-path mismatch vs reference"

    # Exercise the generic fallback path (C does not divide 128) as well.
    C2 = 48
    x2 = jax.random.normal(k4, (2, 64, C2), dtype=jnp.float32)
    w2 = jnp.ones((C2,), jnp.float32)
    b2 = jnp.zeros((C2,), jnp.float32)
    out2 = jax.block_until_ready(withbias_layernorm(x2, w2, b2))
    ref2 = _reference_layernorm(x2, w2, b2)
    assert jnp.max(jnp.abs(out2 - ref2)) < 1e-4, "row-wise-path mismatch vs reference"

    print("KERNEL_OK")
</pallas_src>

<mosaic_0001>
module attributes {stable_mosaic.version = 11 : i64} {
  func.func @_packed_ln_kernel(%arg0: i32, %arg1: memref<128x128xf32, #tpu.memory_space<vmem>>, %arg2: memref<128x128xf32, #tpu.memory_space<vmem>>, %arg3: memref<1x128xf32, #tpu.memory_space<vmem>>, %arg4: memref<1x128xf32, #tpu.memory_space<vmem>>, %arg5: memref<128x128xf32, #tpu.memory_space<vmem>>) attributes {dimension_semantics = [#tpu.dimension_semantics<parallel>], iteration_bounds = array<i64: 1>, scalar_prefetch = 0 : i64, scratch_operands = 0 : i64, tpu.core_type = #tpu.core_type<tc>, window_params = [{transform_indices = @transform_0, window_bounds = array<i64: 128, 128>}, {pipeline_mode = #tpu.pipeline_mode<synchronous>, transform_indices = @transform_1, window_bounds = array<i64: 128, 128>}, {pipeline_mode = #tpu.pipeline_mode<synchronous>, transform_indices = @transform_2, window_bounds = array<i64: 1, 128>}, {pipeline_mode = #tpu.pipeline_mode<synchronous>, transform_indices = @transform_3, window_bounds = array<i64: 1, 128>}, {transform_indices = @transform_4, window_bounds = array<i64: 128, 128>}]} {
    %c0 = arith.constant 0 : index
    %c0_0 = arith.constant 0 : index
    %0 = vector.load %arg1[%c0, %c0_0] : memref<128x128xf32, #tpu.memory_space<vmem>>, vector<128x128xf32>
    %c0_1 = arith.constant 0 : index
    %c0_2 = arith.constant 0 : index
    %1 = vector.load %arg2[%c0_1, %c0_2] : memref<128x128xf32, #tpu.memory_space<vmem>>, vector<128x128xf32>
    %cst = arith.constant dense<0.000000e+00> : vector<128x128xf32>
    %2 = tpu.matmul %0, %1, %cst {dimension_numbers = #tpu.dot_dimension_numbers<[1], [0], [0], [1], [0, 0, 1, 1], [], []>, precision = #tpu.contract_precision<fp32>} : vector<128x128xf32>, vector<128x128xf32>, vector<128x128xf32> -> vector<128x128xf32>
    %3 = arith.mulf %0, %0 : vector<128x128xf32>
    %cst_3 = arith.constant dense<0.000000e+00> : vector<128x128xf32>
    %4 = tpu.matmul %3, %1, %cst_3 {dimension_numbers = #tpu.dot_dimension_numbers<[1], [0], [0], [1], [0, 0, 1, 1], [], []>, precision = #tpu.contract_precision<fp32>} : vector<128x128xf32>, vector<128x128xf32>, vector<128x128xf32> -> vector<128x128xf32>
    %cst_4 = arith.constant 3.125000e-02 : f32
    %5 = vector.broadcast %cst_4 : f32 to vector<128x128xf32>
    %6 = arith.mulf %2, %5 : vector<128x128xf32>
    %cst_5 = arith.constant 3.125000e-02 : f32
    %7 = vector.broadcast %cst_5 : f32 to vector<128x128xf32>
    %8 = arith.mulf %4, %7 : vector<128x128xf32>
    %9 = arith.mulf %6, %6 : vector<128x128xf32>
    %10 = arith.subf %8, %9 : vector<128x128xf32>
    %cst_6 = arith.constant 9.99999974E-6 : f32
    %11 = vector.broadcast %cst_6 : f32 to vector<128x128xf32>
    %12 = arith.addf %10, %11 : vector<128x128xf32>
    %13 = math.rsqrt %12 : vector<128x128xf32>
    %14 = arith.subf %0, %6 : vector<128x128xf32>
    %15 = arith.mulf %14, %13 : vector<128x128xf32>
    %c0_7 = arith.constant 0 : index
    %c0_8 = arith.constant 0 : index
    %16 = vector.load %arg3[%c0_7, %c0_8] : memref<1x128xf32, #tpu.memory_space<vmem>>, vector<1x128xf32>
    %17 = vector.broadcast %16 : vector<1x128xf32> to vector<128x128xf32>
    %18 = arith.mulf %15, %17 : vector<128x128xf32>
    %c0_9 = arith.constant 0 : index
    %c0_10 = arith.constant 0 : index
    %19 = vector.load %arg4[%c0_9, %c0_10] : memref<1x128xf32, #tpu.memory_space<vmem>>, vector<1x128xf32>
    %20 = vector.broadcast %19 : vector<1x128xf32> to vector<128x128xf32>
    %21 = arith.addf %18, %20 : vector<128x128xf32>
    %c0_11 = arith.constant 0 : index
    %c0_12 = arith.constant 0 : index
    %22 = vector.load %arg5[%c0_11, %c0_12] : memref<128x128xf32, #tpu.memory_space<vmem>>, vector<128x128xf32>
    tpu.vector_store %arg5[%c0_11, %c0_12], %21 {strides = array<i32>} : memref<128x128xf32, #tpu.memory_space<vmem>>, vector<128x128xf32>,
    return
  }
  func.func @transform_0(%arg0: i32) -> (i32, i32) {
    %c0_i32 = arith.constant 0 : i32
    %c0_i32_0 = arith.constant 0 : i32
    return %arg0, %c0_i32 : i32, i32
  }
  func.func @transform_1(%arg0: i32) -> (i32, i32) {
    %c0_i32 = arith.constant 0 : i32
    %c0_i32_0 = arith.constant 0 : i32
    %c0_i32_1 = arith.constant 0 : i32
    return %c0_i32, %c0_i32_0 : i32, i32
  }
  func.func @transform_2(%arg0: i32) -> (i32, i32) {
    %c0_i32 = arith.constant 0 : i32
    %c0_i32_0 = arith.constant 0 : i32
    %c0_i32_1 = arith.constant 0 : i32
    return %c0_i32, %c0_i32_0 : i32, i32
  }
  func.func @transform_3(%arg0: i32) -> (i32, i32) {
    %c0_i32 = arith.constant 0 : i32
    %c0_i32_0 = arith.constant 0 : i32
    %c0_i32_1 = arith.constant 0 : i32
    return %c0_i32, %c0_i32_0 : i32, i32
  }
  func.func @transform_4(%arg0: i32) -> (i32, i32) {
    %c0_i32 = arith.constant 0 : i32
    %c0_i32_0 = arith.constant 0 : i32
    return %arg0, %c0_i32 : i32, i32
  }
}

</mosaic_0001>

<llo_original>
// kernel: tpu_custom_call.1
$region0: #{tpu_custom_call.1}
  #allocation0 [shape = 'u32[]', space=smem, size = 0x4, offset = 0x4, fixed_abs, tag = 'smem constant byte address 0x4 - core index']
  #allocation1 [shape = 'u32[144,128]{1,0:T(1,128)}', space=vmem, size = 0x12000, scoped, tag = 'internal scratch']
  %s0 = inlined_call_operand.hbm [shape: f32[128,128], index: 0, kind: input, shape index: {}]
  %s1 = inlined_call_operand.hbm [shape: f32[128,128], index: 1, kind: input, shape index: {}]
  %s2 = inlined_call_operand.vmem [shape: f32[1,128], index: 2, kind: input, shape index: {}]
  %s3 = inlined_call_operand.vmem [shape: f32[1,128], index: 3, kind: input, shape index: {}]
  %s4 = inlined_call_operand.hbm [shape: f32[128,128], index: 4, kind: output, shape index: {}]
  %s5 = sld [smem:[#allocation0]]
  $region34: #{tpu_custom_call.1} parent=0
    _
  %s7 = ssub.s32 1, %s5
  %s8 = scalar_select 0, %s7, %s5
  $region1: #{tpu_custom_call.1} parent=0
    #allocation2 [shape = 'u8[65536]{0}', space=vmem, size = 0x10000, scoped, tag = 'input window, operand 0, single buffered']
    #allocation3 [shape = 's32[1]{0}', space=sflag, size = 0x4, scoped, tag = 'scoped memory for tpu_custom_call.1']
    #allocation4 [shape = 's32[1]{0}', space=sflag, size = 0x4, scoped, tag = 'scoped memory for tpu_custom_call.1']
    #allocation5 [shape = 'u8[65536]{0}', space=vmem, size = 0x10000, scoped, tag = 'input window, operand 1, single buffered']
    #allocation6 [shape = 's32[1]{0}', space=sflag, size = 0x4, scoped, tag = 'scoped memory for tpu_custom_call.1']
    #allocation7 [shape = 'u8[65536]{0}', space=vmem, size = 0x10000, scoped, tag = 'output window, operand 0, single buffered']
    %9 = vsyncpa [#allocation3], 0
    %10 = vsyncpa [#allocation6], 0
    %11 = vsyncpa [#allocation4], 0
    // Predicated region
    $region2: #{tpu_custom_call.1} parent=1 // pred_check
      _
    $region3: #{tpu_custom_call.1} parent=1 // pred_check_branch
      %13 = sbr.rel (0) target = $region5
    $region4: #{tpu_custom_call.1} parent=1 // pred_region
      %s15 = ssub.s32 2048, 2048
      %16 = vsyncadd [#allocation3], %s15
      %s17 = sshll.u32 [#allocation2], 4
      %s18 = int_to_ptr.vmem [resolvable:$true] %s17
      %23 = dma.hbm_to_vmem [thread:$0]  %s0, 2048, %s18, [#allocation3], 128, 128, 8
    $region5: #{tpu_custom_call.1} parent=1 // pred_fallthru
      _
    // Predicated region
    $region6: #{tpu_custom_call.1} parent=1 // pred_check
      _
    $region7: #{tpu_custom_call.1} parent=1 // pred_check_branch
      %25 = sbr.rel (0) target = $region9
    $region8: #{tpu_custom_call.1} parent=1 // pred_region
      %s27 = ssub.s32 2048, 2048
      %28 = vsyncadd [#allocation6], %s27
      %s29 = sshll.u32 [#allocation5], 4
      %s30 = int_to_ptr.vmem [resolvable:$true] %s29
      %35 = dma.hbm_to_vmem [thread:$0]  %s1, 2048, %s30, [#allocation6], 128, 128, 8
    $region9: #{tpu_custom_call.1} parent=1 // pred_fallthru
      _
    // Predicated region
    $region10: #{tpu_custom_call.1} parent=1 // pred_check
      _
    $region11: #{tpu_custom_call.1} parent=1 // pred_check_branch
      %37 = sbr.rel (0) target = $region13
    $region12: #{tpu_custom_call.1} parent=1 // pred_region
      _
    $region13: #{tpu_custom_call.1} parent=1 // pred_fallthru
      _
    // Predicated region
    $region14: #{tpu_custom_call.1} parent=1 // pred_check
      _
    $region15: #{tpu_custom_call.1} parent=1 // pred_check_branch
      %39 = sbr.rel (0) target = $region17
    $region16: #{tpu_custom_call.1} parent=1 // pred_region
      _
    $region17: #{tpu_custom_call.1} parent=1 // pred_fallthru
      _
    // Predicated region
    $region18: #{tpu_custom_call.1} parent=1 // pred_check
      _
    $region19: #{tpu_custom_call.1} parent=1 // pred_check_branch
      %41 = sbr.rel (0) target = $region21
    $region20: #{tpu_custom_call.1} parent=1 // pred_region
      %42 = dma.done [#allocation3], 2048
    $region21: #{tpu_custom_call.1} parent=1 // pred_fallthru
      _
    // Predicated region
    $region22: #{tpu_custom_call.1} parent=1 // pred_check
      _
    $region23: #{tpu_custom_call.1} parent=1 // pred_check_branch
      %44 = sbr.rel (0) target = $region25
    $region24: #{tpu_custom_call.1} parent=1 // pred_region
      %45 = dma.done [#allocation6], 2048
    $region25: #{tpu_custom_call.1} parent=1 // pred_fallthru
      _
    %v46 = vld [vmem:[#allocation2] sm:$0xff]
    %v47 = vld [vmem:[#allocation2 + $0x8] sm:$0xff]
    %v48 = vld [vmem:[#allocation2 + $0x10] sm:$0xff]
    %v49 = vld [vmem:[#allocation2 + $0x18] sm:$0xff]
    %v50 = vld [vmem:[#allocation2 + $0x20] sm:$0xff]
    %v51 = vld [vmem:[#allocation2 + $0x28] sm:$0xff]
    %v52 = vld [vmem:[#allocation2 + $0x30] sm:$0xff]
    %v53 = vld [vmem:[#allocation2 + $0x38] sm:$0xff]
    %v54 = vld [vmem:[#allocation2 + $0x40] sm:$0xff]
    %v55 = vld [vmem:[#allocation2 + $0x48] sm:$0xff]
    %v56 = vld [vmem:[#allocation2 + $0x50] sm:$0xff]
    %v57 = vld [vmem:[#allocation2 + $0x58] sm:$0xff]
    %v58 = vld [vmem:[#allocation2 + $0x60] sm:$0xff]
    %v59 = vld [vmem:[#allocation2 + $0x68] sm:$0xff]
    %v60 = vld [vmem:[#allocation2 + $0x70] sm:$0xff]
    %v61 = vld [vmem:[#allocation2 + $0x78] sm:$0xff]
    %v62 = vld [vmem:[#allocation5] sm:$0xff]
    %v63 = vld [vmem:[#allocation5 + $0x8] sm:$0xff]
    %v64 = vld [vmem:[#allocation5 + $0x10] sm:$0xff]
    %v65 = vld [vmem:[#allocation5 + $0x18] sm:$0xff]
    %v66 = vld [vmem:[#allocation5 + $0x20] sm:$0xff]
    %v67 = vld [vmem:[#allocation5 + $0x28] sm:$0xff]
    %v68 = vld [vmem:[#allocation5 + $0x30] sm:$0xff]
    %v69 = vld [vmem:[#allocation5 + $0x38] sm:$0xff]
    %v70 = vld [vmem:[#allocation5 + $0x40] sm:$0xff]
    %v71 = vld [vmem:[#allocation5 + $0x48] sm:$0xff]
    %v72 = vld [vmem:[#allocation5 + $0x50] sm:$0xff]
    %v73 = vld [vmem:[#allocation5 + $0x58] sm:$0xff]
    %v74 = vld [vmem:[#allocation5 + $0x60] sm:$0xff]
    %v75 = vld [vmem:[#allocation5 + $0x68] sm:$0xff]
    %v76 = vld [vmem:[#allocation5 + $0x70] sm:$0xff]
    %v77 = vld [vmem:[#allocation5 + $0x78] sm:$0xff]
    %78 = vmatprep.subr.mxu0 0.0
    %v79 = vand.u32 %v77, 4294901760
    %80 = vmatpush1.msra.mxu0 %v79
    %81 = vmatprep.subr.mxu0 0.0
    %v82 = vand.u32 %v76, 4294901760
    %83 = vmatpush1.msra.mxu0 %v82
    %84 = vmatprep.subr.mxu0 0.0
    %v85 = vand.u32 %v75, 4294901760
    %86 = vmatpush1.msra.mxu0 %v85
    %87 = vmatprep.subr.mxu0 0.0
    %v88 = vand.u32 %v74, 4294901760
    %89 = vmatpush1.msra.mxu0 %v88
    %90 = vmatprep.subr.mxu0 0.0
    %v91 = vand.u32 %v73, 4294901760
    %92 = vmatpush1.msra.mxu0 %v91
    %93 = vmatprep.subr.mxu0 0.0
    %v94 = vand.u32 %v72, 4294901760
    %95 = vmatpush1.msra.mxu0 %v94
    %96 = vmatprep.subr.mxu0 0.0
    %v97 = vand.u32 %v71, 4294901760
    %98 = vmatpush1.msra.mxu0 %v97
    %99 = vmatprep.subr.mxu0 0.0
    %v100 = vand.u32 %v70, 4294901760
    %101 = vmatpush1.msra.mxu0 %v100
    %102 = vmatprep.subr.mxu0 0.0
    %v103 = vand.u32 %v69, 4294901760
    %104 = vmatpush1.msra.mxu0 %v103
    %105 = vmatprep.subr.mxu0 0.0
    %v106 = vand.u32 %v68, 4294901760
    %107 = vmatpush1.msra.mxu0 %v106
    %108 = vmatprep.subr.mxu0 0.0
    %v109 = vand.u32 %v67, 4294901760
    %110 = vmatpush1.msra.mxu0 %v109
    %111 = vmatprep.subr.mxu0 0.0
    %v112 = vand.u32 %v66, 4294901760
    %113 = vmatpush1.msra.mxu0 %v112
    %114 = vmatprep.subr.mxu0 0.0
    %v115 = vand.u32 %v65, 4294901760
    %116 = vmatpush1.msra.mxu0 %v115
    %117 = vmatprep.subr.mxu0 0.0
    %v118 = vand.u32 %v64, 4294901760
    %119 = vmatpush1.msra.mxu0 %v118
    %120 = vmatprep.subr.mxu0 0.0
    %v121 = vand.u32 %v63, 4294901760
    %122 = vmatpush1.msra.mxu0 %v121
    %123 = vmatprep.subr.mxu0 0.0
    %v124 = vand.u32 %v62, 4294901760
    %125 = vmatpush1.msra.mxu0 %v124
    %126 = vmatprep.subr.mxu0 0.0
    %127 = vmatpush2.msra.mxu0 0.0
    %128 = vmatprep.subr.mxu0 0.0
    %129 = vmatpush2.msra.mxu0 0.0
    %130 = vmatprep.subr.mxu0 0.0
    %131 = vmatpush2.msra.mxu0 0.0
    %132 = vmatprep.subr.mxu0 0.0
    %133 = vmatpush2.msra.mxu0 0.0
    %134 = vmatprep.subr.mxu0 0.0
    %135 = vmatpush2.msra.mxu0 0.0
    %136 = vmatprep.subr.mxu0 0.0
    %137 = vmatpush2.msra.mxu0 0.0
    %138 = vmatprep.subr.mxu0 0.0
    %139 = vmatpush2.msra.mxu0 0.0
    %140 = vmatprep.subr.mxu0 0.0
    %141 = vmatpush2.msra.mxu0 0.0
    %142 = vmatprep.subr.mxu0 0.0
    %143 = vmatpush2.msra.mxu0 0.0
    %144 = vmatprep.subr.mxu0 0.0
    %145 = vmatpush2.msra.mxu0 0.0
    %146 = vmatprep.subr.mxu0 0.0
    %147 = vmatpush2.msra.mxu0 0.0
    %148 = vmatprep.subr.mxu0 0.0
    %149 = vmatpush2.msra.mxu0 0.0
    %150 = vmatprep.subr.mxu0 0.0
    %151 = vmatpush2.msra.mxu0 0.0
    %152 = vmatprep.subr.mxu0 0.0
    %153 = vmatpush2.msra.mxu0 0.0
    %154 = vmatprep.subr.mxu0 0.0
    %155 = vmatpush2.msra.mxu0 0.0
    %156 = vmatprep.subr.mxu0 0.0
    %157 = vmatpush2.msra.mxu0 0.0
    %158 = vmatprep.mubr.f32.mxu0 0.0
    %v159 = vand.u32 %v46, 4294901760
    %v160 = vsub.f32 %v46, %v159
    %v161 = vand.u32 %v160, 4294901760
    %v162 = vsub.f32 %v160, %v161
    %v163 = vand.u32 %v162, 4294901760
    %164 = vmatmul.mubr.f32.gmra.mxu0 %v163
    %v165 = vpop.f32.mrf.mxu0
    %v166 = vadd.f32 0.0, %v165
    %v167 = vpop.f32.mrf.mxu0
    %168 = vmatprep.mubr.f32.mxu0 0.0
    %v169 = vand.u32 %v47, 4294901760
    %v170 = vsub.f32 %v47, %v169
    %v171 = vand.u32 %v170, 4294901760
    %v172 = vsub.f32 %v170, %v171
    %v173 = vand.u32 %v172, 4294901760
    %174 = vmatmul.mubr.f32.gmra.mxu0 %v173
    %v175 = vpop.f32.mrf.mxu0
    %v176 = vadd.f32 0.0, %v175
    %v177 = vpop.f32.mrf.mxu0
    %178 = vmatprep.mubr.f32.mxu0 0.0
    %v179 = vand.u32 %v48, 4294901760
    %v180 = vsub.f32 %v48, %v179
    %v181 = vand.u32 %v180, 4294901760
    %v182 = vsub.f32 %v180, %v181
    %v183 = vand.u32 %v182, 4294901760
    %184 = vmatmul.mubr.f32.gmra.mxu0 %v183
    %v185 = vpop.f32.mrf.mxu0
    %v186 = vadd.f32 0.0, %v185
    %v187 = vpop.f32.mrf.mxu0
    %188 = vmatprep.mubr.f32.mxu0 0.0
    %v189 = vand.u32 %v49, 4294901760
    %v190 = vsub.f32 %v49, %v189
    %v191 = vand.u32 %v190, 4294901760
    %v192 = vsub.f32 %v190, %v191
    %v193 = vand.u32 %v192, 4294901760
    %194 = vmatmul.mubr.f32.gmra.mxu0 %v193
    %v195 = vpop.f32.mrf.mxu0
    %v196 = vadd.f32 0.0, %v195
    %v197 = vpop.f32.mrf.mxu0
    %198 = vmatprep.mubr.f32.mxu0 0.0
    %v199 = vand.u32 %v50, 4294901760
    %v200 = vsub.f32 %v50, %v199
    %v201 = vand.u32 %v200, 4294901760
    %v202 = vsub.f32 %v200, %v201
    %v203 = vand.u32 %v202, 4294901760
    %204 = vmatmul.mubr.f32.gmra.mxu0 %v203
    %v205 = vpop.f32.mrf.mxu0
    %v206 = vadd.f32 0.0, %v205
    %v207 = vpop.f32.mrf.mxu0
    %208 = vmatprep.mubr.f32.mxu0 0.0
    %v209 = vand.u32 %v51, 4294901760
    %v210 = vsub.f32 %v51, %v209
    %v211 = vand.u32 %v210, 4294901760
    %v212 = vsub.f32 %v210, %v211
    %v213 = vand.u32 %v212, 4294901760
    %214 = vmatmul.mubr.f32.gmra.mxu0 %v213
    %v215 = vpop.f32.mrf.mxu0
    %v216 = vadd.f32 0.0, %v215
    %v217 = vpop.f32.mrf.mxu0
    %218 = vmatprep.mubr.f32.mxu0 0.0
    %v219 = vand.u32 %v52, 4294901760
    %v220 = vsub.f32 %v52, %v219
    %v221 = vand.u32 %v220, 4294901760
    %v222 = vsub.f32 %v220, %v221
    %v223 = vand.u32 %v222, 4294901760
    %224 = vmatmul.mubr.f32.gmra.mxu0 %v223
    %v225 = vpop.f32.mrf.mxu0
    %v226 = vadd.f32 0.0, %v225
    %v227 = vpop.f32.mrf.mxu0
    %228 = vmatprep.mubr.f32.mxu0 0.0
    %v229 = vand.u32 %v53, 4294901760
    %v230 = vsub.f32 %v53, %v229
    %v231 = vand.u32 %v230, 4294901760
    %v232 = vsub.f32 %v230, %v231
    %v233 = vand.u32 %v232, 4294901760
    %234 = vmatmul.mubr.f32.gmra.mxu0 %v233
    %v235 = vpop.f32.mrf.mxu0
    %v236 = vadd.f32 0.0, %v235
    %v237 = vpop.f32.mrf.mxu0
    %238 = vmatprep.mubr.f32.mxu0 0.0
    %v239 = vand.u32 %v54, 4294901760
    %v240 = vsub.f32 %v54, %v239
    %v241 = vand.u32 %v240, 4294901760
    %v242 = vsub.f32 %v240, %v241
    %v243 = vand.u32 %v242, 4294901760
    %244 = vmatmul.mubr.f32.gmra.mxu0 %v243
    %v245 = vpop.f32.mrf.mxu0
    %v246 = vadd.f32 0.0, %v245
    %v247 = vpop.f32.mrf.mxu0
    %248 = vmatprep.mubr.f32.mxu0 0.0
    %v249 = vand.u32 %v55, 4294901760
    %v250 = vsub.f32 %v55, %v249
    %v251 = vand.u32 %v250, 4294901760
    %v252 = vsub.f32 %v250, %v251
    %v253 = vand.u32 %v252, 4294901760
    %254 = vmatmul.mubr.f32.gmra.mxu0 %v253
    %v255 = vpop.f32.mrf.mxu0
    %v256 = vadd.f32 0.0, %v255
    %v257 = vpop.f32.mrf.mxu0
    %258 = vmatprep.mubr.f32.mxu0 0.0
    %v259 = vand.u32 %v56, 4294901760
    %v260 = vsub.f32 %v56, %v259
    %v261 = vand.u32 %v260, 4294901760
    %v262 = vsub.f32 %v260, %v261
    %v263 = vand.u32 %v262, 4294901760
    %264 = vmatmul.mubr.f32.gmra.mxu0 %v263
    %v265 = vpop.f32.mrf.mxu0
    %v266 = vadd.f32 0.0, %v265
    %v267 = vpop.f32.mrf.mxu0
    %268 = vmatprep.mubr.f32.mxu0 0.0
    %v269 = vand.u32 %v57, 4294901760
    %v270 = vsub.f32 %v57, %v269
    %v271 = vand.u32 %v270, 4294901760
    %v272 = vsub.f32 %v270, %v271
    %v273 = vand.u32 %v272, 4294901760
    %274 = vmatmul.mubr.f32.gmra.mxu0 %v273
    %v275 = vpop.f32.mrf.mxu0
    %v276 = vadd.f32 0.0, %v275
    %v277 = vpop.f32.mrf.mxu0
    %278 = vmatprep.mubr.f32.mxu0 0.0
    %v279 = vand.u32 %v58, 4294901760
    %v280 = vsub.f32 %v58, %v279
    %v281 = vand.u32 %v280, 4294901760
    %v282 = vsub.f32 %v280, %v281
    %v283 = vand.u32 %v282, 4294901760
    %284 = vmatmul.mubr.f32.gmra.mxu0 %v283
    %v285 = vpop.f32.mrf.mxu0
    %v286 = vadd.f32 0.0, %v285
    %v287 = vpop.f32.mrf.mxu0
    %288 = vmatprep.mubr.f32.mxu0 0.0
    %v289 = vand.u32 %v59, 4294901760
    %v290 = vsub.f32 %v59, %v289
    %v291 = vand.u32 %v290, 4294901760
    %v292 = vsub.f32 %v290, %v291
    %v293 = vand.u32 %v292, 4294901760
    %294 = vmatmul.mubr.f32.gmra.mxu0 %v293
    %v295 = vpop.f32.mrf.mxu0
    %v296 = vadd.f32 0.0, %v295
    %v297 = vpop.f32.mrf.mxu0
    %298 = vmatprep.mubr.f32.mxu0 0.0
    %v299 = vand.u32 %v60, 4294901760
    %v300 = vsub.f32 %v60, %v299
    %v301 = vand.u32 %v300, 4294901760
    %v302 = vsub.f32 %v300, %v301
    %v303 = vand.u32 %v302, 4294901760
    %304 = vmatmul.mubr.f32.gmra.mxu0 %v303
    %v305 = vpop.f32.mrf.mxu0
    %v306 = vadd.f32 0.0, %v305
    %v307 = vpop.f32.mrf.mxu0
    %308 = vmatprep.mubr.f32.mxu0 0.0
    %v309 = vand.u32 %v61, 4294901760
    %v310 = vsub.f32 %v61, %v309
    %v311 = vand.u32 %v310, 4294901760
    %v312 = vsub.f32 %v310, %v311
    %v313 = vand.u32 %v312, 4294901760
    %314 = vmatmul.mubr.f32.gmra.mxu0 %v313
    %v315 = vpop.f32.mrf.mxu0
    %v316 = vadd.f32 0.0, %v315
    %v317 = vpop.f32.mrf.mxu0
    %318 = vdwg.mxu0
    %319 = vmatprep.subr.mxu0 0.0
    %v320 = vand.u32 %v77, 4294901760
    %v321 = vsub.f32 %v77, %v320
    %v322 = vand.u32 %v321, 4294901760
    %v323 = vsub.f32 %v321, %v322
    %v324 = vand.u32 %v323, 4294901760
    %325 = vmatpush1.msra.mxu0 %v324
    %326 = vmatprep.subr.mxu0 0.0
    %v327 = vand.u32 %v76, 4294901760
    %v328 = vsub.f32 %v76, %v327
    %v329 = vand.u32 %v328, 4294901760
    %v330 = vsub.f32 %v328, %v329
    %v331 = vand.u32 %v330, 4294901760
    %332 = vmatpush1.msra.mxu0 %v331
    %333 = vmatprep.subr.mxu0 0.0
    %v334 = vand.u32 %v75, 4294901760
    %v335 = vsub.f32 %v75, %v334
    %v336 = vand.u32 %v335, 4294901760
    %v337 = vsub.f32 %v335, %v336
    %v338 = vand.u32 %v337, 4294901760
    %339 = vmatpush1.msra.mxu0 %v338
    %340 = vmatprep.subr.mxu0 0.0
    %v341 = vand.u32 %v74, 4294901760
    %v342 = vsub.f32 %v74, %v341
    %v343 = vand.u32 %v342, 4294901760
    %v344 = vsub.f32 %v342, %v343
    %v345 = vand.u32 %v344, 4294901760
    %346 = vmatpush1.msra.mxu0 %v345
    %347 = vmatprep.subr.mxu0 0.0
    %v348 = vand.u32 %v73, 4294901760
    %v349 = vsub.f32 %v73, %v348
    %v350 = vand.u32 %v349, 4294901760
    %v351 = vsub.f32 %v349, %v350
    %v352 = vand.u32 %v351, 4294901760
    %353 = vmatpush1.msra.mxu0 %v352
    %354 = vmatprep.subr.mxu0 0.0
    %v355 = vand.u32 %v72, 4294901760
    %v356 = vsub.f32 %v72, %v355
    %v357 = vand.u32 %v356, 4294901760
    %v358 = vsub.f32 %v356, %v357
    %v359 = vand.u32 %v358, 4294901760
    %360 = vmatpush1.msra.mxu0 %v359
    %361 = vmatprep.subr.mxu0 0.0
    %v362 = vand.u32 %v71, 4294901760
    %v363 = vsub.f32 %v71, %v362
    %v364 = vand.u32 %v363, 4294901760
    %v365 = vsub.f32 %v363, %v364
    %v366 = vand.u32 %v365, 4294901760
    %367 = vmatpush1.msra.mxu0 %v366
    %368 = vmatprep.subr.mxu0 0.0
    %v369 = vand.u32 %v70, 4294901760
    %v370 = vsub.f32 %v70, %v369
    %v371 = vand.u32 %v370, 4294901760
    %v372 = vsub.f32 %v370, %v371
    %v373 = vand.u32 %v372, 4294901760
    %374 = vmatpush1.msra.mxu0 %v373
    %375 = vmatprep.subr.mxu0 0.0
    %v376 = vand.u32 %v69, 4294901760
    %v377 = vsub.f32 %v69, %v376
    %v378 = vand.u32 %v377, 4294901760
    %v379 = vsub.f32 %v377, %v378
    %v380 = vand.u32 %v379, 4294901760
    %381 = vmatpush1.msra.mxu0 %v380
    %382 = vmatprep.subr.mxu0 0.0
    %v383 = vand.u32 %v68, 4294901760
    %v384 = vsub.f32 %v68, %v383
    %v385 = vand.u32 %v384, 4294901760
    %v386 = vsub.f32 %v384, %v385
    %v387 = vand.u32 %v386, 4294901760
    %388 = vmatpush1.msra.mxu0 %v387
    %389 = vmatprep.subr.mxu0 0.0
    %v390 = vand.u32 %v67, 4294901760
    %v391 = vsub.f32 %v67, %v390
    %v392 = vand.u32 %v391, 4294901760
    %v393 = vsub.f32 %v391, %v392
    %v394 = vand.u32 %v393, 4294901760
    %395 = vmatpush1.msra.mxu0 %v394
    %396 = vmatprep.subr.mxu0 0.0
    %v397 = vand.u32 %v66, 4294901760
    %v398 = vsub.f32 %v66, %v397
    %v399 = vand.u32 %v398, 4294901760
    %v400 = vsub.f32 %v398, %v399
    %v401 = vand.u32 %v400, 4294901760
    %402 = vmatpush1.msra.mxu0 %v401
    %403 = vmatprep.subr.mxu0 0.0
    %v404 = vand.u32 %v65, 4294901760
    %v405 = vsub.f32 %v65, %v404
    %v406 = vand.u32 %v405, 4294901760
    %v407 = vsub.f32 %v405, %v406
    %v408 = vand.u32 %v407, 4294901760
    %409 = vmatpush1.msra.mxu0 %v408
    %410 = vmatprep.subr.mxu0 0.0
    %v411 = vand.u32 %v64, 4294901760
    %v412 = vsub.f32 %v64, %v411
    %v413 = vand.u32 %v412, 4294901760
    %v414 = vsub.f32 %v412, %v413
    %v415 = vand.u32 %v414, 4294901760
    %416 = vmatpush1.msra.mxu0 %v415
    %417 = vmatprep.subr.mxu0 0.0
    %v418 = vand.u32 %v63, 4294901760
    %v419 = vsub.f32 %v63, %v418
    %v420 = vand.u32 %v419, 4294901760
    %v421 = vsub.f32 %v419, %v420
    %v422 = vand.u32 %v421, 4294901760
    %423 = vmatpush1.msra.mxu0 %v422
    %424 = vmatprep.subr.mxu0 0.0
    %v425 = vand.u32 %v62, 4294901760
    %v426 = vsub.f32 %v62, %v425
    %v427 = vand.u32 %v426, 4294901760
    %v428 = vsub.f32 %v426, %v427
    %v429 = vand.u32 %v428, 4294901760
    %430 = vmatpush1.msra.mxu0 %v429
    %431 = vmatprep.subr.mxu0 0.0
    %432 = vmatpush2.msra.mxu0 0.0
    %433 = vmatprep.subr.mxu0 0.0
    %434 = vmatpush2.msra.mxu0 0.0
    %435 = vmatprep.subr.mxu0 0.0
    %436 = vmatpush2.msra.mxu0 0.0
    %437 = vmatprep.subr.mxu0 0.0
    %438 = vmatpush2.msra.mxu0 0.0
    %439 = vmatprep.subr.mxu0 0.0
    %440 = vmatpush2.msra.mxu0 0.0
    %441 = vmatprep.subr.mxu0 0.0
    %442 = vmatpush2.msra.mxu0 0.0
    %443 = vmatprep.subr.mxu0 0.0
    %444 = vmatpush2.msra.mxu0 0.0
    %445 = vmatprep.subr.mxu0 0.0
    %446 = vmatpush2.msra.mxu0 0.0
    %447 = vmatprep.subr.mxu0 0.0
    %448 = vmatpush2.msra.mxu0 0.0
    %449 = vmatprep.subr.mxu0 0.0
    %450 = vmatpush2.msra.mxu0 0.0
    %451 = vmatprep.subr.mxu0 0.0
    %452 = vmatpush2.msra.mxu0 0.0
    %453 = vmatprep.subr.mxu0 0.0
    %454 = vmatpush2.msra.mxu0 0.0
    %455 = vmatprep.subr.mxu0 0.0
    %456 = vmatpush2.msra.mxu0 0.0
    %457 = vmatprep.subr.mxu0 0.0
    %458 = vmatpush2.msra.mxu0 0.0
    %459 = vmatprep.subr.mxu0 0.0
    %460 = vmatpush2.msra.mxu0 0.0
    %461 = vmatprep.subr.mxu0 0.0
    %462 = vmatpush2.msra.mxu0 0.0
    %463 = vmatprep.mubr.f32.mxu0 0.0
    %v464 = vand.u32 %v46, 4294901760
    %465 = vmatmul.mubr.f32.gmra.mxu0 %v464
    %v466 = vpop.f32.mrf.mxu0
    %v467 = vadd.f32 %v166, %v466
    %v468 = vpop.f32.mrf.mxu0
    %469 = vmatprep.mubr.f32.mxu0 0.0
    %v470 = vand.u32 %v47, 4294901760
    %471 = vmatmul.mubr.f32.gmra.mxu0 %v470
    %v472 = vpop.f32.mrf.mxu0
    %v473 = vadd.f32 %v176, %v472
    %v474 = vpop.f32.mrf.mxu0
    %475 = vmatprep.mubr.f32.mxu0 0.0
    %v476 = vand.u32 %v48, 4294901760
    %477 = vmatmul.mubr.f32.gmra.mxu0 %v476
    %v478 = vpop.f32.mrf.mxu0
    %v479 = vadd.f32 %v186, %v478
    %v480 = vpop.f32.mrf.mxu0
    %481 = vmatprep.mubr.f32.mxu0 0.0
    %v482 = vand.u32 %v49, 4294901760
    %483 = vmatmul.mubr.f32.gmra.mxu0 %v482
    %v484 = vpop.f32.mrf.mxu0
    %v485 = vadd.f32 %v196, %v484
    %v486 = vpop.f32.mrf.mxu0
    %487 = vmatprep.mubr.f32.mxu0 0.0
    %v488 = vand.u32 %v50, 4294901760
    %489 = vmatmul.mubr.f32.gmra.mxu0 %v488
    %v490 = vpop.f32.mrf.mxu0
    %v491 = vadd.f32 %v206, %v490
    %v492 = vpop.f32.mrf.mxu0
    %493 = vmatprep.mubr.f32.mxu0 0.0
    %v494 = vand.u32 %v51, 4294901760
    %495 = vmatmul.mubr.f32.gmra.mxu0 %v494
    %v496 = vpop.f32.mrf.mxu0
    %v497 = vadd.f32 %v216, %v496
    %v498 = vpop.f32.mrf.mxu0
    %499 = vmatprep.mubr.f32.mxu0 0.0
    %v500 = vand.u32 %v52, 4294901760
    %501 = vmatmul.mubr.f32.gmra.mxu0 %v500
    %v502 = vpop.f32.mrf.mxu0
    %v503 = vadd.f32 %v226, %v502
    %v504 = vpop.f32.mrf.mxu0
    %505 = vmatprep.mubr.f32.mxu0 0.0
    %v506 = vand.u32 %v53, 4294901760
    %507 = vmatmul.mubr.f32.gmra.mxu0 %v506
    %v508 = vpop.f32.mrf.mxu0
    %v509 = vadd.f32 %v236, %v508
    %v510 = vpop.f32.mrf.mxu0
    %511 = vmatprep.mubr.f32.mxu0 0.0
    %v512 = vand.u32 %v54, 4294901760
    %513 = vmatmul.mubr.f32.gmra.mxu0 %v512
    %v514 = vpop.f32.mrf.mxu0
    %v515 = vadd.f32 %v246, %v514
    %v516 = vpop.f32.mrf.mxu0
    %517 = vmatprep.mubr.f32.mxu0 0.0
    %v518 = vand.u32 %v55, 4294901760
    %519 = vmatmul.mubr.f32.gmra.mxu0 %v518
    %v520 = vpop.f32.mrf.mxu0
    %v521 = vadd.f32 %v256, %v520
    %v522 = vpop.f32.mrf.mxu0
    %523 = vmatprep.mubr.f32.mxu0 0.0
    %v524 = vand.u32 %v56, 4294901760
    %525 = vmatmul.mubr.f32.gmra.mxu0 %v524
    %v526 = vpop.f32.mrf.mxu0
    %v527 = vadd.f32 %v266, %v526
    %v528 = vpop.f32.mrf.mxu0
    %529 = vmatprep.mubr.f32.mxu0 0.0
    %v530 = vand.u32 %v57, 4294901760
    %531 = vmatmul.mubr.f32.gmra.mxu0 %v530
    %v532 = vpop.f32.mrf.mxu0
    %v533 = vadd.f32 %v276, %v532
    %v534 = vpop.f32.mrf.mxu0
    %535 = vmatprep.mubr.f32.mxu0 0.0
    %v536 = vand.u32 %v58, 4294901760
    %537 = vmatmul.mubr.f32.gmra.mxu0 %v536
    %v538 = vpop.f32.mrf.mxu0
    %v539 = vadd.f32 %v286, %v538
    %v540 = vpop.f32.mrf.mxu0
    %541 = vmatprep.mubr.f32.mxu0 0.0
    %v542 = vand.u32 %v59, 4294901760
    %543 = vmatmul.mubr.f32.gmra.mxu0 %v542
    %v544 = vpop.f32.mrf.mxu0
    %v545 = vadd.f32 %v296, %v544
    %v546 = vpop.f32.mrf.mxu0
    %547 = vmatprep.mubr.f32.mxu0 0.0
    %v548 = vand.u32 %v60, 4294901760
    %549 = vmatmul.mubr.f32.gmra.mxu0 %v548
    %v550 = vpop.f32.mrf.mxu0
    %v551 = vadd.f32 %v306, %v550
    %v552 = vpop.f32.mrf.mxu0
    %553 = vmatprep.mubr.f32.mxu0 0.0
    %v554 = vand.u32 %v61, 4294901760
    %555 = vmatmul.mubr.f32.gmra.mxu0 %v554
    %v556 = vpop.f32.mrf.mxu0
    %v557 = vadd.f32 %v316, %v556
    %v558 = vpop.f32.mrf.mxu0
    %559 = vdwg.mxu0
    %560 = vmatprep.subr.mxu0 0.0
    %v561 = vand.u32 %v77, 4294901760
    %v562 = vsub.f32 %v77, %v561
    %563 = vmatpush1.msra.mxu0 %v562
    %564 = vmatprep.subr.mxu0 0.0
    %v565 = vand.u32 %v76, 4294901760
    %v566 = vsub.f32 %v76, %v565
    %567 = vmatpush1.msra.mxu0 %v566
    %568 = vmatprep.subr.mxu0 0.0
    %v569 = vand.u32 %v75, 4294901760
    %v570 = vsub.f32 %v75, %v569
    %571 = vmatpush1.msra.mxu0 %v570
    %572 = vmatprep.subr.mxu0 0.0
    %v573 = vand.u32 %v74, 4294901760
    %v574 = vsub.f32 %v74, %v573
    %575 = vmatpush1.msra.mxu0 %v574
    %576 = vmatprep.subr.mxu0 0.0
    %v577 = vand.u32 %v73, 4294901760
    %v578 = vsub.f32 %v73, %v577
    %579 = vmatpush1.msra.mxu0 %v578
    %580 = vmatprep.subr.mxu0 0.0
    %v581 = vand.u32 %v72, 4294901760
    %v582 = vsub.f32 %v72, %v581
    %583 = vmatpush1.msra.mxu0 %v582
    %584 = vmatprep.subr.mxu0 0.0
    %v585 = vand.u32 %v71, 4294901760
    %v586 = vsub.f32 %v71, %v585
    %587 = vmatpush1.msra.mxu0 %v586
    %588 = vmatprep.subr.mxu0 0.0
    %v589 = vand.u32 %v70, 4294901760
    %v590 = vsub.f32 %v70, %v589
    %591 = vmatpush1.msra.mxu0 %v590
    %592 = vmatprep.subr.mxu0 0.0
    %v593 = vand.u32 %v69, 4294901760
    %v594 = vsub.f32 %v69, %v593
    %595 = vmatpush1.msra.mxu0 %v594
    %596 = vmatprep.subr.mxu0 0.0
    %v597 = vand.u32 %v68, 4294901760
    %v598 = vsub.f32 %v68, %v597
    %599 = vmatpush1.msra.mxu0 %v598
    %600 = vmatprep.subr.mxu0 0.0
    %v601 = vand.u32 %v67, 4294901760
    %v602 = vsub.f32 %v67, %v601
    %603 = vmatpush1.msra.mxu0 %v602
    %604 = vmatprep.subr.mxu0 0.0
    %v605 = vand.u32 %v66, 4294901760
    %v606 = vsub.f32 %v66, %v605
    %607 = vmatpush1.msra.mxu0 %v606
    %608 = vmatprep.subr.mxu0 0.0
    %v609 = vand.u32 %v65, 4294901760
    %v610 = vsub.f32 %v65, %v609
    %611 = vmatpush1.msra.mxu0 %v610
    %612 = vmatprep.subr.mxu0 0.0
    %v613 = vand.u32 %v64, 4294901760
    %v614 = vsub.f32 %v64, %v613
    %615 = vmatpush1.msra.mxu0 %v614
    %616 = vmatprep.subr.mxu0 0.0
    %v617 = vand.u32 %v63, 4294901760
    %v618 = vsub.f32 %v63, %v617
    %619 = vmatpush1.msra.mxu0 %v618
    %620 = vmatprep.subr.mxu0 0.0
    %v621 = vand.u32 %v62, 4294901760
    %v622 = vsub.f32 %v62, %v621
    %623 = vmatpush1.msra.mxu0 %v622
    %624 = vmatprep.subr.mxu0 0.0
    %625 = vmatpush2.msra.mxu0 0.0
    %626 = vmatprep.subr.mxu0 0.0
    %627 = vmatpush2.msra.mxu0 0.0
    %628 = vmatprep.subr.mxu0 0.0
    %629 = vmatpush2.msra.mxu0 0.0
    %630 = vmatprep.subr.mxu0 0.0
    %631 = vmatpush2.msra.mxu0 0.0
    %632 = vmatprep.subr.mxu0 0.0
    %633 = vmatpush2.msra.mxu0 0.0
    %634 = vmatprep.subr.mxu0 0.0
    %635 = vmatpush2.msra.mxu0 0.0
    %636 = vmatprep.subr.mxu0 0.0
    %637 = vmatpush2.msra.mxu0 0.0
    %638 = vmatprep.subr.mxu0 0.0
    %639 = vmatpush2.msra.mxu0 0.0
    %640 = vmatprep.subr.mxu0 0.0
    %641 = vmatpush2.msra.mxu0 0.0
    %642 = vmatprep.subr.mxu0 0.0
    %643 = vmatpush2.msra.mxu0 0.0
    %644 = vmatprep.subr.mxu0 0.0
    %645 = vmatpush2.msra.mxu0 0.0
    %646 = vmatprep.subr.mxu0 0.0
    %647 = vmatpush2.msra.mxu0 0.0
    %648 = vmatprep.subr.mxu0 0.0
    %649 = vmatpush2.msra.mxu0 0.0
    %650 = vmatprep.subr.mxu0 0.0
    %651 = vmatpush2.msra.mxu0 0.0
    %652 = vmatprep.subr.mxu0 0.0
    %653 = vmatpush2.msra.mxu0 0.0
    %654 = vmatprep.subr.mxu0 0.0
    %655 = vmatpush2.msra.mxu0 0.0
    %656 = vmatprep.mubr.f32.mxu0 0.0
    %v657 = vand.u32 %v46, 4294901760
    %v658 = vsub.f32 %v46, %v657
    %659 = vmatmul.mubr.f32.gmra.mxu0 %v658
    %v660 = vpop.f32.mrf.mxu0
    %v661 = vadd.f32 %v467, %v660
    %v662 = vpop.f32.mrf.mxu0
    %663 = vmatprep.mubr.f32.mxu0 0.0
    %v664 = vand.u32 %v47, 4294901760
    %v665 = vsub.f32 %v47, %v664
    %666 = vmatmul.mubr.f32.gmra.mxu0 %v665
    %v667 = vpop.f32.mrf.mxu0
    %v668 = vadd.f32 %v473, %v667
    %v669 = vpop.f32.mrf.mxu0
    %670 = vmatprep.mubr.f32.mxu0 0.0
    %v671 = vand.u32 %v48, 4294901760
    %v672 = vsub.f32 %v48, %v671
    %673 = vmatmul.mubr.f32.gmra.mxu0 %v672
    %v674 = vpop.f32.mrf.mxu0
    %v675 = vadd.f32 %v479, %v674
    %v676 = vpop.f32.mrf.mxu0
    %677 = vmatprep.mubr.f32.mxu0 0.0
    %v678 = vand.u32 %v49, 4294901760
    %v679 = vsub.f32 %v49, %v678
    %680 = vmatmul.mubr.f32.gmra.mxu0 %v679
    %v681 = vpop.f32.mrf.mxu0
    %v682 = vadd.f32 %v485, %v681
    %v683 = vpop.f32.mrf.mxu0
    %684 = vmatprep.mubr.f32.mxu0 0.0
    %v685 = vand.u32 %v50, 4294901760
    %v686 = vsub.f32 %v50, %v685
    %687 = vmatmul.mubr.f32.gmra.mxu0 %v686
    %v688 = vpop.f32.mrf.mxu0
    %v689 = vadd.f32 %v491, %v688
    %v690 = vpop.f32.mrf.mxu0
    %691 = vmatprep.mubr.f32.mxu0 0.0
    %v692 = vand.u32 %v51, 4294901760
    %v693 = vsub.f32 %v51, %v692
    %694 = vmatmul.mubr.f32.gmra.mxu0 %v693
    %v695 = vpop.f32.mrf.mxu0
    %v696 = vadd.f32 %v497, %v695
    %v697 = vpop.f32.mrf.mxu0
    %698 = vmatprep.mubr.f32.mxu0 0.0
    %v699 = vand.u32 %v52, 4294901760
    %v700 = vsub.f32 %v52, %v699
    %701 = vmatmul.mubr.f32.gmra.mxu0 %v700
    %v702 = vpop.f32.mrf.mxu0
    %v703 = vadd.f32 %v503, %v702
    %v704 = vpop.f32.mrf.mxu0
    %705 = vmatprep.mubr.f32.mxu0 0.0
    %v706 = vand.u32 %v53, 4294901760
    %v707 = vsub.f32 %v53, %v706
    %708 = vmatmul.mubr.f32.gmra.mxu0 %v707
    %v709 = vpop.f32.mrf.mxu0
    %v710 = vadd.f32 %v509, %v709
    %v711 = vpop.f32.mrf.mxu0
    %712 = vmatprep.mubr.f32.mxu0 0.0
    %v713 = vand.u32 %v54, 4294901760
    %v714 = vsub.f32 %v54, %v713
    %715 = vmatmul.mubr.f32.gmra.mxu0 %v714
    %v716 = vpop.f32.mrf.mxu0
    %v717 = vadd.f32 %v515, %v716
    %v718 = vpop.f32.mrf.mxu0
    %719 = vmatprep.mubr.f32.mxu0 0.0
    %v720 = vand.u32 %v55, 4294901760
    %v721 = vsub.f32 %v55, %v720
    %722 = vmatmul.mubr.f32.gmra.mxu0 %v721
    %v723 = vpop.f32.mrf.mxu0
    %v724 = vadd.f32 %v521, %v723
    %v725 = vpop.f32.mrf.mxu0
    %726 = vmatprep.mubr.f32.mxu0 0.0
    %v727 = vand.u32 %v56, 4294901760
    %v728 = vsub.f32 %v56, %v727
    %729 = vmatmul.mubr.f32.gmra.mxu0 %v728
    %v730 = vpop.f32.mrf.mxu0
    %v731 = vadd.f32 %v527, %v730
    %v732 = vpop.f32.mrf.mxu0
    %733 = vmatprep.mubr.f32.mxu0 0.0
    %v734 = vand.u32 %v57, 4294901760
    %v735 = vsub.f32 %v57, %v734
    %736 = vmatmul.mubr.f32.gmra.mxu0 %v735
    %v737 = vpop.f32.mrf.mxu0
    %v738 = vadd.f32 %v533, %v737
    %v739 = vpop.f32.mrf.mxu0
    %740 = vmatprep.mubr.f32.mxu0 0.0
    %v741 = vand.u32 %v58, 4294901760
    %v742 = vsub.f32 %v58, %v741
    %743 = vmatmul.mubr.f32.gmra.mxu0 %v742
    %v744 = vpop.f32.mrf.mxu0
    %v745 = vadd.f32 %v539, %v744
    %v746 = vpop.f32.mrf.mxu0
    %747 = vmatprep.mubr.f32.mxu0 0.0
    %v748 = vand.u32 %v59, 4294901760
    %v749 = vsub.f32 %v59, %v748
    %750 = vmatmul.mubr.f32.gmra.mxu0 %v749
    %v751 = vpop.f32.mrf.mxu0
    %v752 = vadd.f32 %v545, %v751
    %v753 = vpop.f32.mrf.mxu0
    %754 = vmatprep.mubr.f32.mxu0 0.0
    %v755 = vand.u32 %v60, 4294901760
    %v756 = vsub.f32 %v60, %v755
    %757 = vmatmul.mubr.f32.gmra.mxu0 %v756
    %v758 = vpop.f32.mrf.mxu0
    %v759 = vadd.f32 %v551, %v758
    %v760 = vpop.f32.mrf.mxu0
    %761 = vmatprep.mubr.f32.mxu0 0.0
    %v762 = vand.u32 %v61, 4294901760
    %v763 = vsub.f32 %v61, %v762
    %764 = vmatmul.mubr.f32.gmra.mxu0 %v763
    %v765 = vpop.f32.mrf.mxu0
    %v766 = vadd.f32 %v557, %v765
    %v767 = vpop.f32.mrf.mxu0
    %768 = vdwg.mxu0
    %769 = vmatprep.subr.mxu0 0.0
    %v770 = vand.u32 %v77, 4294901760
    %771 = vmatpush1.msra.mxu0 %v770
    %772 = vmatprep.subr.mxu0 0.0
    %v773 = vand.u32 %v76, 4294901760
    %774 = vmatpush1.msra.mxu0 %v773
    %775 = vmatprep.subr.mxu0 0.0
    %v776 = vand.u32 %v75, 4294901760
    %777 = vmatpush1.msra.mxu0 %v776
    %778 = vmatprep.subr.mxu0 0.0
    %v779 = vand.u32 %v74, 4294901760
    %780 = vmatpush1.msra.mxu0 %v779
    %781 = vmatprep.subr.mxu0 0.0
    %v782 = vand.u32 %v73, 4294901760
    %783 = vmatpush1.msra.mxu0 %v782
    %784 = vmatprep.subr.mxu0 0.0
    %v785 = vand.u32 %v72, 4294901760
    %786 = vmatpush1.msra.mxu0 %v785
    %787 = vmatprep.subr.mxu0 0.0
    %v788 = vand.u32 %v71, 4294901760
    %789 = vmatpush1.msra.mxu0 %v788
    %790 = vmatprep.subr.mxu0 0.0
    %v791 = vand.u32 %v70, 4294901760
    %792 = vmatpush1.msra.mxu0 %v791
    %793 = vmatprep.subr.mxu0 0.0
    %v794 = vand.u32 %v69, 4294901760
    %795 = vmatpush1.msra.mxu0 %v794
    %796 = vmatprep.subr.mxu0 0.0
    %v797 = vand.u32 %v68, 4294901760
    %798 = vmatpush1.msra.mxu0 %v797
    %799 = vmatprep.subr.mxu0 0.0
    %v800 = vand.u32 %v67, 4294901760
    %801 = vmatpush1.msra.mxu0 %v800
    %802 = vmatprep.subr.mxu0 0.0
    %v803 = vand.u32 %v66, 4294901760
    %804 = vmatpush1.msra.mxu0 %v803
    %805 = vmatprep.subr.mxu0 0.0
    %v806 = vand.u32 %v65, 4294901760
    %807 = vmatpush1.msra.mxu0 %v806
    %808 = vmatprep.subr.mxu0 0.0
    %v809 = vand.u32 %v64, 4294901760
    %810 = vmatpush1.msra.mxu0 %v809
    %811 = vmatprep.subr.mxu0 0.0
    %v812 = vand.u32 %v63, 4294901760
    %813 = vmatpush1.msra.mxu0 %v812
    %814 = vmatprep.subr.mxu0 0.0
    %v815 = vand.u32 %v62, 4294901760
    %816 = vmatpush1.msra.mxu0 %v815
    %817 = vmatprep.subr.mxu0 0.0
    %818 = vmatpush2.msra.mxu0 0.0
    %819 = vmatprep.subr.mxu0 0.0
    %820 = vmatpush2.msra.mxu0 0.0
    %821 = vmatprep.subr.mxu0 0.0
    %822 = vmatpush2.msra.mxu0 0.0
    %823 = vmatprep.subr.mxu0 0.0
    %824 = vmatpush2.msra.mxu0 0.0
    %825 = vmatprep.subr.mxu0 0.0
    %826 = vmatpush2.msra.mxu0 0.0
    %827 = vmatprep.subr.mxu0 0.0
    %828 = vmatpush2.msra.mxu0 0.0
    %829 = vmatprep.subr.mxu0 0.0
    %830 = vmatpush2.msra.mxu0 0.0
    %831 = vmatprep.subr.mxu0 0.0
    %832 = vmatpush2.msra.mxu0 0.0
    %833 = vmatprep.subr.mxu0 0.0
    %834 = vmatpush2.msra.mxu0 0.0
    %835 = vmatprep.subr.mxu0 0.0
    %836 = vmatpush2.msra.mxu0 0.0
    %837 = vmatprep.subr.mxu0 0.0
    %838 = vmatpush2.msra.mxu0 0.0
    %839 = vmatprep.subr.mxu0 0.0
    %840 = vmatpush2.msra.mxu0 0.0
    %841 = vmatprep.subr.mxu0 0.0
    %842 = vmatpush2.msra.mxu0 0.0
    %843 = vmatprep.subr.mxu0 0.0
    %844 = vmatpush2.msra.mxu0 0.0
    %845 = vmatprep.subr.mxu0 0.0
    %846 = vmatpush2.msra.mxu0 0.0
    %847 = vmatprep.subr.mxu0 0.0
    %848 = vmatpush2.msra.mxu0 0.0
    %849 = vmatprep.mubr.f32.mxu0 0.0
    %v850 = vand.u32 %v46, 4294901760
    %v851 = vsub.f32 %v46, %v850
    %v852 = vand.u32 %v851, 4294901760
    %853 = vmatmul.mubr.f32.gmra.mxu0 %v852
    %v854 = vpop.f32.mrf.mxu0
    %v855 = vadd.f32 %v661, %v854
    %v856 = vpop.f32.mrf.mxu0
    %857 = vmatprep.mubr.f32.mxu0 0.0
    %v858 = vand.u32 %v47, 4294901760
    %v859 = vsub.f32 %v47, %v858
    %v860 = vand.u32 %v859, 4294901760
    %861 = vmatmul.mubr.f32.gmra.mxu0 %v860
    %v862 = vpop.f32.mrf.mxu0
    %v863 = vadd.f32 %v668, %v862
    %v864 = vpop.f32.mrf.mxu0
    %865 = vmatprep.mubr.f32.mxu0 0.0
    %v866 = vand.u32 %v48, 4294901760
    %v867 = vsub.f32 %v48, %v866
    %v868 = vand.u32 %v867, 4294901760
    %869 = vmatmul.mubr.f32.gmra.mxu0 %v868
    %v870 = vpop.f32.mrf.mxu0
    %v871 = vadd.f32 %v675, %v870
    %v872 = vpop.f32.mrf.mxu0
    %873 = vmatprep.mubr.f32.mxu0 0.0
    %v874 = vand.u32 %v49, 4294901760
    %v875 = vsub.f32 %v49, %v874
    %v876 = vand.u32 %v875, 4294901760
    %877 = vmatmul.mubr.f32.gmra.mxu0 %v876
    %v878 = vpop.f32.mrf.mxu0
    %v879 = vadd.f32 %v682, %v878
    %v880 = vpop.f32.mrf.mxu0
    %881 = vmatprep.mubr.f32.mxu0 0.0
    %v882 = vand.u32 %v50, 4294901760
    %v883 = vsub.f32 %v50, %v882
    %v884 = vand.u32 %v883, 4294901760
    %885 = vmatmul.mubr.f32.gmra.mxu0 %v884
    %v886 = vpop.f32.mrf.mxu0
    %v887 = vadd.f32 %v689, %v886
    %v888 = vpop.f32.mrf.mxu0
    %889 = vmatprep.mubr.f32.mxu0 0.0
    %v890 = vand.u32 %v51, 4294901760
    %v891 = vsub.f32 %v51, %v890
    %v892 = vand.u32 %v891, 4294901760
    %893 = vmatmul.mubr.f32.gmra.mxu0 %v892
    %v894 = vpop.f32.mrf.mxu0
    %v895 = vadd.f32 %v696, %v894
    %v896 = vpop.f32.mrf.mxu0
    %897 = vmatprep.mubr.f32.mxu0 0.0
    %v898 = vand.u32 %v52, 4294901760
    %v899 = vsub.f32 %v52, %v898
    %v900 = vand.u32 %v899, 4294901760
    %901 = vmatmul.mubr.f32.gmra.mxu0 %v900
    %v902 = vpop.f32.mrf.mxu0
    %v903 = vadd.f32 %v703, %v902
    %v904 = vpop.f32.mrf.mxu0
    %905 = vmatprep.mubr.f32.mxu0 0.0
    %v906 = vand.u32 %v53, 4294901760
    %v907 = vsub.f32 %v53, %v906
    %v908 = vand.u32 %v907, 4294901760
    %909 = vmatmul.mubr.f32.gmra.mxu0 %v908
    %v910 = vpop.f32.mrf.mxu0
    %v911 = vadd.f32 %v710, %v910
    %v912 = vpop.f32.mrf.mxu0
    %913 = vmatprep.mubr.f32.mxu0 0.0
    %v914 = vand.u32 %v54, 4294901760
    %v915 = vsub.f32 %v54, %v914
    %v916 = vand.u32 %v915, 4294901760
    %917 = vmatmul.mubr.f32.gmra.mxu0 %v916
    %v918 = vpop.f32.mrf.mxu0
    %v919 = vadd.f32 %v717, %v918
    %v920 = vpop.f32.mrf.mxu0
    %921 = vmatprep.mubr.f32.mxu0 0.0
    %v922 = vand.u32 %v55, 4294901760
    %v923 = vsub.f32 %v55, %v922
    %v924 = vand.u32 %v923, 4294901760
    %925 = vmatmul.mubr.f32.gmra.mxu0 %v924
    %v926 = vpop.f32.mrf.mxu0
    %v927 = vadd.f32 %v724, %v926
    %v928 = vpop.f32.mrf.mxu0
    %929 = vmatprep.mubr.f32.mxu0 0.0
    %v930 = vand.u32 %v56, 4294901760
    %v931 = vsub.f32 %v56, %v930
    %v932 = vand.u32 %v931, 4294901760
    %933 = vmatmul.mubr.f32.gmra.mxu0 %v932
    %v934 = vpop.f32.mrf.mxu0
    %v935 = vadd.f32 %v731, %v934
    %v936 = vpop.f32.mrf.mxu0
    %937 = vmatprep.mubr.f32.mxu0 0.0
    %v938 = vand.u32 %v57, 4294901760
    %v939 = vsub.f32 %v57, %v938
    %v940 = vand.u32 %v939, 4294901760
    %941 = vmatmul.mubr.f32.gmra.mxu0 %v940
    %v942 = vpop.f32.mrf.mxu0
    %v943 = vadd.f32 %v738, %v942
    %v944 = vpop.f32.mrf.mxu0
    %945 = vmatprep.mubr.f32.mxu0 0.0
    %v946 = vand.u32 %v58, 4294901760
    %v947 = vsub.f32 %v58, %v946
    %v948 = vand.u32 %v947, 4294901760
    %949 = vmatmul.mubr.f32.gmra.mxu0 %v948
    %v950 = vpop.f32.mrf.mxu0
    %v951 = vadd.f32 %v745, %v950
    %v952 = vpop.f32.mrf.mxu0
    %953 = vmatprep.mubr.f32.mxu0 0.0
    %v954 = vand.u32 %v59, 4294901760
    %v955 = vsub.f32 %v59, %v954
    %v956 = vand.u32 %v955, 4294901760
    %957 = vmatmul.mubr.f32.gmra.mxu0 %v956
    %v958 = vpop.f32.mrf.mxu0
    %v959 = vadd.f32 %v752, %v958
    %v960 = vpop.f32.mrf.mxu0
    %961 = vmatprep.mubr.f32.mxu0 0.0
    %v962 = vand.u32 %v60, 4294901760
    %v963 = vsub.f32 %v60, %v962
    %v964 = vand.u32 %v963, 4294901760
    %965 = vmatmul.mubr.f32.gmra.mxu0 %v964
    %v966 = vpop.f32.mrf.mxu0
    %v967 = vadd.f32 %v759, %v966
    %v968 = vpop.f32.mrf.mxu0
    %969 = vmatprep.mubr.f32.mxu0 0.0
    %v970 = vand.u32 %v61, 4294901760
    %v971 = vsub.f32 %v61, %v970
    %v972 = vand.u32 %v971, 4294901760
    %973 = vmatmul.mubr.f32.gmra.mxu0 %v972
    %v974 = vpop.f32.mrf.mxu0
    %v975 = vadd.f32 %v766, %v974
    %v976 = vpop.f32.mrf.mxu0
    %977 = vdwg.mxu0
    %978 = vmatprep.subr.mxu0 0.0
    %v979 = vand.u32 %v77, 4294901760
    %v980 = vsub.f32 %v77, %v979
    %v981 = vand.u32 %v980, 4294901760
    %982 = vmatpush1.msra.mxu0 %v981
    %983 = vmatprep.subr.mxu0 0.0
    %v984 = vand.u32 %v76, 4294901760
    %v985 = vsub.f32 %v76, %v984
    %v986 = vand.u32 %v985, 4294901760
    %987 = vmatpush1.msra.mxu0 %v986
    %988 = vmatprep.subr.mxu0 0.0
    %v989 = vand.u32 %v75, 4294901760
    %v990 = vsub.f32 %v75, %v989
    %v991 = vand.u32 %v990, 4294901760
    %992 = vmatpush1.msra.mxu0 %v991
    %993 = vmatprep.subr.mxu0 0.0
    %v994 = vand.u32 %v74, 4294901760
    %v995 = vsub.f32 %v74, %v994
    %v996 = vand.u32 %v995, 4294901760
    %997 = vmatpush1.msra.mxu0 %v996
    %998 = vmatprep.subr.mxu0 0.0
    %v999 = vand.u32 %v73, 4294901760
    %v1000 = vsub.f32 %v73, %v999
    %v1001 = vand.u32 %v1000, 4294901760
    %1002 = vmatpush1.msra.mxu0 %v1001
    %1003 = vmatprep.subr.mxu0 0.0
    %v1004 = vand.u32 %v72, 4294901760
    %v1005 = vsub.f32 %v72, %v1004
    %v1006 = vand.u32 %v1005, 4294901760
    %1007 = vmatpush1.msra.mxu0 %v1006
    %1008 = vmatprep.subr.mxu0 0.0
    %v1009 = vand.u32 %v71, 4294901760
    %v1010 = vsub.f32 %v71, %v1009
    %v1011 = vand.u32 %v1010, 4294901760
    %1012 = vmatpush1.msra.mxu0 %v1011
    %1013 = vmatprep.subr.mxu0 0.0
    %v1014 = vand.u32 %v70, 4294901760
    %v1015 = vsub.f32 %v70, %v1014
    %v1016 = vand.u32 %v1015, 4294901760
    %1017 = vmatpush1.msra.mxu0 %v1016
    %1018 = vmatprep.subr.mxu0 0.0
    %v1019 = vand.u32 %v69, 4294901760
    %v1020 = vsub.f32 %v69, %v1019
    %v1021 = vand.u32 %v1020, 4294901760
    %1022 = vmatpush1.msra.mxu0 %v1021
    %1023 = vmatprep.subr.mxu0 0.0
    %v1024 = vand.u32 %v68, 4294901760
    %v1025 = vsub.f32 %v68, %v1024
    %v1026 = vand.u32 %v1025, 4294901760
    %1027 = vmatpush1.msra.mxu0 %v1026
    %1028 = vmatprep.subr.mxu0 0.0
    %v1029 = vand.u32 %v67, 4294901760
    %v1030 = vsub.f32 %v67, %v1029
    %v1031 = vand.u32 %v1030, 4294901760
    %1032 = vmatpush1.msra.mxu0 %v1031
    %1033 = vmatprep.subr.mxu0 0.0
    %v1034 = vand.u32 %v66, 4294901760
    %v1035 = vsub.f32 %v66, %v1034
    %v1036 = vand.u32 %v1035, 4294901760
    %1037 = vmatpush1.msra.mxu0 %v1036
    %1038 = vmatprep.subr.mxu0 0.0
    %v1039 = vand.u32 %v65, 4294901760
    %v1040 = vsub.f32 %v65, %v1039
    %v1041 = vand.u32 %v1040, 4294901760
    %1042 = vmatpush1.msra.mxu0 %v1041
    %1043 = vmatprep.subr.mxu0 0.0
    %v1044 = vand.u32 %v64, 4294901760
    %v1045 = vsub.f32 %v64, %v1044
    %v1046 = vand.u32 %v1045, 4294901760
    %1047 = vmatpush1.msra.mxu0 %v1046
    %1048 = vmatprep.subr.mxu0 0.0
    %v1049 = vand.u32 %v63, 4294901760
    %v1050 = vsub.f32 %v63, %v1049
    %v1051 = vand.u32 %v1050, 4294901760
    %1052 = vmatpush1.msra.mxu0 %v1051
    %1053 = vmatprep.subr.mxu0 0.0
    %v1054 = vand.u32 %v62, 4294901760
    %v1055 = vsub.f32 %v62, %v1054
    %v1056 = vand.u32 %v1055, 4294901760
    %1057 = vmatpush1.msra.mxu0 %v1056
    %1058 = vmatprep.subr.mxu0 0.0
    %1059 = vmatpush2.msra.mxu0 0.0
    %1060 = vmatprep.subr.mxu0 0.0
    %1061 = vmatpush2.msra.mxu0 0.0
    %1062 = vmatprep.subr.mxu0 0.0
    %1063 = vmatpush2.msra.mxu0 0.0
    %1064 = vmatprep.subr.mxu0 0.0
    %1065 = vmatpush2.msra.mxu0 0.0
    %1066 = vmatprep.subr.mxu0 0.0
    %1067 = vmatpush2.msra.mxu0 0.0
    %1068 = vmatprep.subr.mxu0 0.0
    %1069 = vmatpush2.msra.mxu0 0.0
    %1070 = vmatprep.subr.mxu0 0.0
    %1071 = vmatpush2.msra.mxu0 0.0
    %1072 = vmatprep.subr.mxu0 0.0
    %1073 = vmatpush2.msra.mxu0 0.0
    %1074 = vmatprep.subr.mxu0 0.0
    %1075 = vmatpush2.msra.mxu0 0.0
    %1076 = vmatprep.subr.mxu0 0.0
    %1077 = vmatpush2.msra.mxu0 0.0
    %1078 = vmatprep.subr.mxu0 0.0
    %1079 = vmatpush2.msra.mxu0 0.0
    %1080 = vmatprep.subr.mxu0 0.0
    %1081 = vmatpush2.msra.mxu0 0.0
    %1082 = vmatprep.subr.mxu0 0.0
    %1083 = vmatpush2.msra.mxu0 0.0
    %1084 = vmatprep.subr.mxu0 0.0
    %1085 = vmatpush2.msra.mxu0 0.0
    %1086 = vmatprep.subr.mxu0 0.0
    %1087 = vmatpush2.msra.mxu0 0.0
    %1088 = vmatprep.subr.mxu0 0.0
    %1089 = vmatpush2.msra.mxu0 0.0
    %1090 = vmatprep.mubr.f32.mxu0 0.0
    %v1091 = vand.u32 %v46, 4294901760
    %1092 = vmatmul.mubr.f32.gmra.mxu0 %v1091
    %v1093 = vpop.f32.mrf.mxu0
    %v1094 = vadd.f32 %v855, %v1093
    %v1095 = vpop.f32.mrf.mxu0
    %1096 = vmatprep.mubr.f32.mxu0 0.0
    %v1097 = vand.u32 %v47, 4294901760
    %1098 = vmatmul.mubr.f32.gmra.mxu0 %v1097
    %v1099 = vpop.f32.mrf.mxu0
    %v1100 = vadd.f32 %v863, %v1099
    %v1101 = vpop.f32.mrf.mxu0
    %1102 = vmatprep.mubr.f32.mxu0 0.0
    %v1103 = vand.u32 %v48, 4294901760
    %1104 = vmatmul.mubr.f32.gmra.mxu0 %v1103
    %v1105 = vpop.f32.mrf.mxu0
    %v1106 = vadd.f32 %v871, %v1105
    %v1107 = vpop.f32.mrf.mxu0
    %1108 = vmatprep.mubr.f32.mxu0 0.0
    %v1109 = vand.u32 %v49, 4294901760
    %1110 = vmatmul.mubr.f32.gmra.mxu0 %v1109
    %v1111 = vpop.f32.mrf.mxu0
    %v1112 = vadd.f32 %v879, %v1111
    %v1113 = vpop.f32.mrf.mxu0
    %1114 = vmatprep.mubr.f32.mxu0 0.0
    %v1115 = vand.u32 %v50, 4294901760
    %1116 = vmatmul.mubr.f32.gmra.mxu0 %v1115
    %v1117 = vpop.f32.mrf.mxu0
    %v1118 = vadd.f32 %v887, %v1117
    %v1119 = vpop.f32.mrf.mxu0
    %1120 = vmatprep.mubr.f32.mxu0 0.0
    %v1121 = vand.u32 %v51, 4294901760
    %1122 = vmatmul.mubr.f32.gmra.mxu0 %v1121
    %v1123 = vpop.f32.mrf.mxu0
    %v1124 = vadd.f32 %v895, %v1123
    %v1125 = vpop.f32.mrf.mxu0
    %1126 = vmatprep.mubr.f32.mxu0 0.0
    %v1127 = vand.u32 %v52, 4294901760
    %1128 = vmatmul.mubr.f32.gmra.mxu0 %v1127
    %v1129 = vpop.f32.mrf.mxu0
    %v1130 = vadd.f32 %v903, %v1129
    %v1131 = vpop.f32.mrf.mxu0
    %1132 = vmatprep.mubr.f32.mxu0 0.0
    %v1133 = vand.u32 %v53, 4294901760
    %1134 = vmatmul.mubr.f32.gmra.mxu0 %v1133
    %v1135 = vpop.f32.mrf.mxu0
    %v1136 = vadd.f32 %v911, %v1135
    %v1137 = vpop.f32.mrf.mxu0
    %1138 = vmatprep.mubr.f32.mxu0 0.0
    %v1139 = vand.u32 %v54, 4294901760
    %1140 = vmatmul.mubr.f32.gmra.mxu0 %v1139
    %v1141 = vpop.f32.mrf.mxu0
    %v1142 = vadd.f32 %v919, %v1141
    %v1143 = vpop.f32.mrf.mxu0
    %1144 = vmatprep.mubr.f32.mxu0 0.0
    %v1145 = vand.u32 %v55, 4294901760
    %1146 = vmatmul.mubr.f32.gmra.mxu0 %v1145
    %v1147 = vpop.f32.mrf.mxu0
    %v1148 = vadd.f32 %v927, %v1147
    %v1149 = vpop.f32.mrf.mxu0
    %1150 = vmatprep.mubr.f32.mxu0 0.0
    %v1151 = vand.u32 %v56, 4294901760
    %1152 = vmatmul.mubr.f32.gmra.mxu0 %v1151
    %v1153 = vpop.f32.mrf.mxu0
    %v1154 = vadd.f32 %v935, %v1153
    %v1155 = vpop.f32.mrf.mxu0
    %1156 = vmatprep.mubr.f32.mxu0 0.0
    %v1157 = vand.u32 %v57, 4294901760
    %1158 = vmatmul.mubr.f32.gmra.mxu0 %v1157
    %v1159 = vpop.f32.mrf.mxu0
    %v1160 = vadd.f32 %v943, %v1159
    %v1161 = vpop.f32.mrf.mxu0
    %1162 = vmatprep.mubr.f32.mxu0 0.0
    %v1163 = vand.u32 %v58, 4294901760
    %1164 = vmatmul.mubr.f32.gmra.mxu0 %v1163
    %v1165 = vpop.f32.mrf.mxu0
    %v1166 = vadd.f32 %v951, %v1165
    %v1167 = vpop.f32.mrf.mxu0
    %1168 = vmatprep.mubr.f32.mxu0 0.0
    %v1169 = vand.u32 %v59, 4294901760
    %1170 = vmatmul.mubr.f32.gmra.mxu0 %v1169
    %v1171 = vpop.f32.mrf.mxu0
    %v1172 = vadd.f32 %v959, %v1171
    %v1173 = vpop.f32.mrf.mxu0
    %1174 = vmatprep.mubr.f32.mxu0 0.0
    %v1175 = vand.u32 %v60, 4294901760
    %1176 = vmatmul.mubr.f32.gmra.mxu0 %v1175
    %v1177 = vpop.f32.mrf.mxu0
    %v1178 = vadd.f32 %v967, %v1177
    %v1179 = vpop.f32.mrf.mxu0
    %1180 = vmatprep.mubr.f32.mxu0 0.0
    %v1181 = vand.u32 %v61, 4294901760
    %1182 = vmatmul.mubr.f32.gmra.mxu0 %v1181
    %v1183 = vpop.f32.mrf.mxu0
    %v1184 = vadd.f32 %v975, %v1183
    %v1185 = vpop.f32.mrf.mxu0
    %1186 = vdwg.mxu0
    %1187 = vmatprep.subr.mxu0 0.0
    %v1188 = vand.u32 %v77, 4294901760
    %1189 = vmatpush1.msra.mxu0 %v1188
    %1190 = vmatprep.subr.mxu0 0.0
    %v1191 = vand.u32 %v76, 4294901760
    %1192 = vmatpush1.msra.mxu0 %v1191
    %1193 = vmatprep.subr.mxu0 0.0
    %v1194 = vand.u32 %v75, 4294901760
    %1195 = vmatpush1.msra.mxu0 %v1194
    %1196 = vmatprep.subr.mxu0 0.0
    %v1197 = vand.u32 %v74, 4294901760
    %1198 = vmatpush1.msra.mxu0 %v1197
    %1199 = vmatprep.subr.mxu0 0.0
    %v1200 = vand.u32 %v73, 4294901760
    %1201 = vmatpush1.msra.mxu0 %v1200
    %1202 = vmatprep.subr.mxu0 0.0
    %v1203 = vand.u32 %v72, 4294901760
    %1204 = vmatpush1.msra.mxu0 %v1203
    %1205 = vmatprep.subr.mxu0 0.0
    %v1206 = vand.u32 %v71, 4294901760
    %1207 = vmatpush1.msra.mxu0 %v1206
    %1208 = vmatprep.subr.mxu0 0.0
    %v1209 = vand.u32 %v70, 4294901760
    %1210 = vmatpush1.msra.mxu0 %v1209
    %1211 = vmatprep.subr.mxu0 0.0
    %v1212 = vand.u32 %v69, 4294901760
    %1213 = vmatpush1.msra.mxu0 %v1212
    %1214 = vmatprep.subr.mxu0 0.0
    %v1215 = vand.u32 %v68, 4294901760
    %1216 = vmatpush1.msra.mxu0 %v1215
    %1217 = vmatprep.subr.mxu0 0.0
    %v1218 = vand.u32 %v67, 4294901760
    %1219 = vmatpush1.msra.mxu0 %v1218
    %1220 = vmatprep.subr.mxu0 0.0
    %v1221 = vand.u32 %v66, 4294901760
    %1222 = vmatpush1.msra.mxu0 %v1221
    %1223 = vmatprep.subr.mxu0 0.0
    %v1224 = vand.u32 %v65, 4294901760
    %1225 = vmatpush1.msra.mxu0 %v1224
    %1226 = vmatprep.subr.mxu0 0.0
    %v1227 = vand.u32 %v64, 4294901760
    %1228 = vmatpush1.msra.mxu0 %v1227
    %1229 = vmatprep.subr.mxu0 0.0
    %v1230 = vand.u32 %v63, 4294901760
    %1231 = vmatpush1.msra.mxu0 %v1230
    %1232 = vmatprep.subr.mxu0 0.0
    %v1233 = vand.u32 %v62, 4294901760
    %1234 = vmatpush1.msra.mxu0 %v1233
    %1235 = vmatprep.subr.mxu0 0.0
    %1236 = vmatpush2.msra.mxu0 0.0
    %1237 = vmatprep.subr.mxu0 0.0
    %1238 = vmatpush2.msra.mxu0 0.0
    %1239 = vmatprep.subr.mxu0 0.0
    %1240 = vmatpush2.msra.mxu0 0.0
    %1241 = vmatprep.subr.mxu0 0.0
    %1242 = vmatpush2.msra.mxu0 0.0
    %1243 = vmatprep.subr.mxu0 0.0
    %1244 = vmatpush2.msra.mxu0 0.0
    %1245 = vmatprep.subr.mxu0 0.0
    %1246 = vmatpush2.msra.mxu0 0.0
    %1247 = vmatprep.subr.mxu0 0.0
    %1248 = vmatpush2.msra.mxu0 0.0
    %1249 = vmatprep.subr.mxu0 0.0
    %1250 = vmatpush2.msra.mxu0 0.0
    %1251 = vmatprep.subr.mxu0 0.0
    %1252 = vmatpush2.msra.mxu0 0.0
    %1253 = vmatprep.subr.mxu0 0.0
    %1254 = vmatpush2.msra.mxu0 0.0
    %1255 = vmatprep.subr.mxu0 0.0
    %1256 = vmatpush2.msra.mxu0 0.0
    %1257 = vmatprep.subr.mxu0 0.0
    %1258 = vmatpush2.msra.mxu0 0.0
    %1259 = vmatprep.subr.mxu0 0.0
    %1260 = vmatpush2.msra.mxu0 0.0
    %1261 = vmatprep.subr.mxu0 0.0
    %1262 = vmatpush2.msra.mxu0 0.0
    %1263 = vmatprep.subr.mxu0 0.0
    %1264 = vmatpush2.msra.mxu0 0.0
    %1265 = vmatprep.subr.mxu0 0.0
    %1266 = vmatpush2.msra.mxu0 0.0
    %1267 = vmatprep.mubr.f32.mxu0 0.0
    %v1268 = vand.u32 %v46, 4294901760
    %1269 = vmatmul.mubr.f32.gmra.mxu0 %v1268
    %v1270 = vpop.f32.mrf.mxu0
    %v1271 = vadd.f32 %v1094, %v1270
    %v1272 = vpop.f32.mrf.mxu0
    %1273 = vmatprep.mubr.f32.mxu0 0.0
    %v1274 = vand.u32 %v47, 4294901760
    %1275 = vmatmul.mubr.f32.gmra.mxu0 %v1274
    %v1276 = vpop.f32.mrf.mxu0
    %v1277 = vadd.f32 %v1100, %v1276
    %v1278 = vpop.f32.mrf.mxu0
    %1279 = vmatprep.mubr.f32.mxu0 0.0
    %v1280 = vand.u32 %v48, 4294901760
    %1281 = vmatmul.mubr.f32.gmra.mxu0 %v1280
    %v1282 = vpop.f32.mrf.mxu0
    %v1283 = vadd.f32 %v1106, %v1282
    %v1284 = vpop.f32.mrf.mxu0
    %1285 = vmatprep.mubr.f32.mxu0 0.0
    %v1286 = vand.u32 %v49, 4294901760
    %1287 = vmatmul.mubr.f32.gmra.mxu0 %v1286
    %v1288 = vpop.f32.mrf.mxu0
    %v1289 = vadd.f32 %v1112, %v1288
    %v1290 = vpop.f32.mrf.mxu0
    %1291 = vmatprep.mubr.f32.mxu0 0.0
    %v1292 = vand.u32 %v50, 4294901760
    %1293 = vmatmul.mubr.f32.gmra.mxu0 %v1292
    %v1294 = vpop.f32.mrf.mxu0
    %v1295 = vadd.f32 %v1118, %v1294
    %v1296 = vpop.f32.mrf.mxu0
    %1297 = vmatprep.mubr.f32.mxu0 0.0
    %v1298 = vand.u32 %v51, 4294901760
    %1299 = vmatmul.mubr.f32.gmra.mxu0 %v1298
    %v1300 = vpop.f32.mrf.mxu0
    %v1301 = vadd.f32 %v1124, %v1300
    %v1302 = vpop.f32.mrf.mxu0
    %1303 = vmatprep.mubr.f32.mxu0 0.0
    %v1304 = vand.u32 %v52, 4294901760
    %1305 = vmatmul.mubr.f32.gmra.mxu0 %v1304
    %v1306 = vpop.f32.mrf.mxu0
    %v1307 = vadd.f32 %v1130, %v1306
    %v1308 = vpop.f32.mrf.mxu0
    %1309 = vmatprep.mubr.f32.mxu0 0.0
    %v1310 = vand.u32 %v53, 4294901760
    %1311 = vmatmul.mubr.f32.gmra.mxu0 %v1310
    %v1312 = vpop.f32.mrf.mxu0
    %v1313 = vadd.f32 %v1136, %v1312
    %v1314 = vpop.f32.mrf.mxu0
    %1315 = vmatprep.mubr.f32.mxu0 0.0
    %v1316 = vand.u32 %v54, 4294901760
    %1317 = vmatmul.mubr.f32.gmra.mxu0 %v1316
    %v1318 = vpop.f32.mrf.mxu0
    %v1319 = vadd.f32 %v1142, %v1318
    %v1320 = vpop.f32.mrf.mxu0
    %1321 = vmatprep.mubr.f32.mxu0 0.0
    %v1322 = vand.u32 %v55, 4294901760
    %1323 = vmatmul.mubr.f32.gmra.mxu0 %v1322
    %v1324 = vpop.f32.mrf.mxu0
    %v1325 = vadd.f32 %v1148, %v1324
    %v1326 = vpop.f32.mrf.mxu0
    %1327 = vmatprep.mubr.f32.mxu0 0.0
    %v1328 = vand.u32 %v56, 4294901760
    %1329 = vmatmul.mubr.f32.gmra.mxu0 %v1328
    %v1330 = vpop.f32.mrf.mxu0
    %v1331 = vadd.f32 %v1154, %v1330
    %v1332 = vpop.f32.mrf.mxu0
    %1333 = vmatprep.mubr.f32.mxu0 0.0
    %v1334 = vand.u32 %v57, 4294901760
    %1335 = vmatmul.mubr.f32.gmra.mxu0 %v1334
    %v1336 = vpop.f32.mrf.mxu0
    %v1337 = vadd.f32 %v1160, %v1336
    %v1338 = vpop.f32.mrf.mxu0
    %1339 = vmatprep.mubr.f32.mxu0 0.0
    %v1340 = vand.u32 %v58, 4294901760
    %1341 = vmatmul.mubr.f32.gmra.mxu0 %v1340
    %v1342 = vpop.f32.mrf.mxu0
    %v1343 = vadd.f32 %v1166, %v1342
    %v1344 = vpop.f32.mrf.mxu0
    %1345 = vmatprep.mubr.f32.mxu0 0.0
    %v1346 = vand.u32 %v59, 4294901760
    %1347 = vmatmul.mubr.f32.gmra.mxu0 %v1346
    %v1348 = vpop.f32.mrf.mxu0
    %v1349 = vadd.f32 %v1172, %v1348
    %v1350 = vpop.f32.mrf.mxu0
    %1351 = vmatprep.mubr.f32.mxu0 0.0
    %v1352 = vand.u32 %v60, 4294901760
    %1353 = vmatmul.mubr.f32.gmra.mxu0 %v1352
    %v1354 = vpop.f32.mrf.mxu0
    %v1355 = vadd.f32 %v1178, %v1354
    %v1356 = vpop.f32.mrf.mxu0
    %1357 = vmatprep.mubr.f32.mxu0 0.0
    %v1358 = vand.u32 %v61, 4294901760
    %1359 = vmatmul.mubr.f32.gmra.mxu0 %v1358
    %v1360 = vpop.f32.mrf.mxu0
    %v1361 = vadd.f32 %v1184, %v1360
    %v1362 = vpop.f32.mrf.mxu0
    %1363 = vdwg.mxu0
    %v1364 = vmul.f32 %v46, %v46
    %v1365 = vmul.f32 %v47, %v47
    %v1366 = vmul.f32 %v48, %v48
    %v1367 = vmul.f32 %v49, %v49
    %v1368 = vmul.f32 %v50, %v50
    %v1369 = vmul.f32 %v51, %v51
    %v1370 = vmul.f32 %v52, %v52
    %v1371 = vmul.f32 %v53, %v53
    %v1372 = vmul.f32 %v54, %v54
    %v1373 = vmul.f32 %v55, %v55
    %v1374 = vmul.f32 %v56, %v56
    %v1375 = vmul.f32 %v57, %v57
    %v1376 = vmul.f32 %v58, %v58
    %v1377 = vmul.f32 %v59, %v59
    %v1378 = vmul.f32 %v60, %v60
    %v1379 = vmul.f32 %v61, %v61
    %1380 = vmatprep.subr.mxu0 0.0
    %v1381 = vand.u32 %v77, 4294901760
    %1382 = vmatpush1.msra.mxu0 %v1381
    %1383 = vmatprep.subr.mxu0 0.0
    %v1384 = vand.u32 %v76, 4294901760
    %1385 = vmatpush1.msra.mxu0 %v1384
    %1386 = vmatprep.subr.mxu0 0.0
    %v1387 = vand.u32 %v75, 4294901760
    %1388 = vmatpush1.msra.mxu0 %v1387
    %1389 = vmatprep.subr.mxu0 0.0
    %v1390 = vand.u32 %v74, 4294901760
    %1391 = vmatpush1.msra.mxu0 %v1390
    %1392 = vmatprep.subr.mxu0 0.0
    %v1393 = vand.u32 %v73, 4294901760
    %1394 = vmatpush1.msra.mxu0 %v1393
    %1395 = vmatprep.subr.mxu0 0.0
    %v1396 = vand.u32 %v72, 4294901760
    %1397 = vmatpush1.msra.mxu0 %v1396
    %1398 = vmatprep.subr.mxu0 0.0
    %v1399 = vand.u32 %v71, 4294901760
    %1400 = vmatpush1.msra.mxu0 %v1399
    %1401 = vmatprep.subr.mxu0 0.0
    %v1402 = vand.u32 %v70, 4294901760
    %1403 = vmatpush1.msra.mxu0 %v1402
    %1404 = vmatprep.subr.mxu0 0.0
    %v1405 = vand.u32 %v69, 4294901760
    %1406 = vmatpush1.msra.mxu0 %v1405
    %1407 = vmatprep.subr.mxu0 0.0
    %v1408 = vand.u32 %v68, 4294901760
    %1409 = vmatpush1.msra.mxu0 %v1408
    %1410 = vmatprep.subr.mxu0 0.0
    %v1411 = vand.u32 %v67, 4294901760
    %1412 = vmatpush1.msra.mxu0 %v1411
    %1413 = vmatprep.subr.mxu0 0.0
    %v1414 = vand.u32 %v66, 4294901760
    %1415 = vmatpush1.msra.mxu0 %v1414
    %1416 = vmatprep.subr.mxu0 0.0
    %v1417 = vand.u32 %v65, 4294901760
    %1418 = vmatpush1.msra.mxu0 %v1417
    %1419 = vmatprep.subr.mxu0 0.0
    %v1420 = vand.u32 %v64, 4294901760
    %1421 = vmatpush1.msra.mxu0 %v1420
    %1422 = vmatprep.subr.mxu0 0.0
    %v1423 = vand.u32 %v63, 4294901760
    %1424 = vmatpush1.msra.mxu0 %v1423
    %1425 = vmatprep.subr.mxu0 0.0
    %v1426 = vand.u32 %v62, 4294901760
    %1427 = vmatpush1.msra.mxu0 %v1426
    %1428 = vmatprep.subr.mxu0 0.0
    %1429 = vmatpush2.msra.mxu0 0.0
    %1430 = vmatprep.subr.mxu0 0.0
    %1431 = vmatpush2.msra.mxu0 0.0
    %1432 = vmatprep.subr.mxu0 0.0
    %1433 = vmatpush2.msra.mxu0 0.0
    %1434 = vmatprep.subr.mxu0 0.0
    %1435 = vmatpush2.msra.mxu0 0.0
    %1436 = vmatprep.subr.mxu0 0.0
    %1437 = vmatpush2.msra.mxu0 0.0
    %1438 = vmatprep.subr.mxu0 0.0
    %1439 = vmatpush2.msra.mxu0 0.0
    %1440 = vmatprep.subr.mxu0 0.0
    %1441 = vmatpush2.msra.mxu0 0.0
    %1442 = vmatprep.subr.mxu0 0.0
    %1443 = vmatpush2.msra.mxu0 0.0
    %1444 = vmatprep.subr.mxu0 0.0
    %1445 = vmatpush2.msra.mxu0 0.0
    %1446 = vmatprep.subr.mxu0 0.0
    %1447 = vmatpush2.msra.mxu0 0.0
    %1448 = vmatprep.subr.mxu0 0.0
    %1449 = vmatpush2.msra.mxu0 0.0
    %1450 = vmatprep.subr.mxu0 0.0
    %1451 = vmatpush2.msra.mxu0 0.0
    %1452 = vmatprep.subr.mxu0 0.0
    %1453 = vmatpush2.msra.mxu0 0.0
    %1454 = vmatprep.subr.mxu0 0.0
    %1455 = vmatpush2.msra.mxu0 0.0
    %1456 = vmatprep.subr.mxu0 0.0
    %1457 = vmatpush2.msra.mxu0 0.0
    %1458 = vmatprep.subr.mxu0 0.0
    %1459 = vmatpush2.msra.mxu0 0.0
    %1460 = vmatprep.mubr.f32.mxu0 0.0
    %v1461 = vand.u32 %v1364, 4294901760
    %v1462 = vsub.f32 %v1364, %v1461
    %v1463 = vand.u32 %v1462, 4294901760
    %v1464 = vsub.f32 %v1462, %v1463
    %v1465 = vand.u32 %v1464, 4294901760
    %1466 = vmatmul.mubr.f32.gmra.mxu0 %v1465
    %v1467 = vpop.f32.mrf.mxu0
    %v1468 = vadd.f32 0.0, %v1467
    %v1469 = vpop.f32.mrf.mxu0
    %1470 = vmatprep.mubr.f32.mxu0 0.0
    %v1471 = vand.u32 %v1365, 4294901760
    %v1472 = vsub.f32 %v1365, %v1471
    %v1473 = vand.u32 %v1472, 4294901760
    %v1474 = vsub.f32 %v1472, %v1473
    %v1475 = vand.u32 %v1474, 4294901760
    %1476 = vmatmul.mubr.f32.gmra.mxu0 %v1475
    %v1477 = vpop.f32.mrf.mxu0
    %v1478 = vadd.f32 0.0, %v1477
    %v1479 = vpop.f32.mrf.mxu0
    %1480 = vmatprep.mubr.f32.mxu0 0.0
    %v1481 = vand.u32 %v1366, 4294901760
    %v1482 = vsub.f32 %v1366, %v1481
    %v1483 = vand.u32 %v1482, 4294901760
    %v1484 = vsub.f32 %v1482, %v1483
    %v1485 = vand.u32 %v1484, 4294901760
    %1486 = vmatmul.mubr.f32.gmra.mxu0 %v1485
    %v1487 = vpop.f32.mrf.mxu0
    %v1488 = vadd.f32 0.0, %v1487
    %v1489 = vpop.f32.mrf.mxu0
    %1490 = vmatprep.mubr.f32.mxu0 0.0
    %v1491 = vand.u32 %v1367, 4294901760
    %v1492 = vsub.f32 %v1367, %v1491
    %v1493 = vand.u32 %v1492, 4294901760
    %v1494 = vsub.f32 %v1492, %v1493
    %v1495 = vand.u32 %v1494, 4294901760
    %1496 = vmatmul.mubr.f32.gmra.mxu0 %v1495
    %v1497 = vpop.f32.mrf.mxu0
    %v1498 = vadd.f32 0.0, %v1497
    %v1499 = vpop.f32.mrf.mxu0
    %1500 = vmatprep.mubr.f32.mxu0 0.0
    %v1501 = vand.u32 %v1368, 4294901760
    %v1502 = vsub.f32 %v1368, %v1501
    %v1503 = vand.u32 %v1502, 4294901760
    %v1504 = vsub.f32 %v1502, %v1503
    %v1505 = vand.u32 %v1504, 4294901760
    %1506 = vmatmul.mubr.f32.gmra.mxu0 %v1505
    %v1507 = vpop.f32.mrf.mxu0
    %v1508 = vadd.f32 0.0, %v1507
    %v1509 = vpop.f32.mrf.mxu0
    %1510 = vmatprep.mubr.f32.mxu0 0.0
    %v1511 = vand.u32 %v1369, 4294901760
    %v1512 = vsub.f32 %v1369, %v1511
    %v1513 = vand.u32 %v1512, 4294901760
    %v1514 = vsub.f32 %v1512, %v1513
    %v1515 = vand.u32 %v1514, 4294901760
    %1516 = vmatmul.mubr.f32.gmra.mxu0 %v1515
    %v1517 = vpop.f32.mrf.mxu0
    %v1518 = vadd.f32 0.0, %v1517
    %v1519 = vpop.f32.mrf.mxu0
    %1520 = vmatprep.mubr.f32.mxu0 0.0
    %v1521 = vand.u32 %v1370, 4294901760
    %v1522 = vsub.f32 %v1370, %v1521
    %v1523 = vand.u32 %v1522, 4294901760
    %v1524 = vsub.f32 %v1522, %v1523
    %v1525 = vand.u32 %v1524, 4294901760
    %1526 = vmatmul.mubr.f32.gmra.mxu0 %v1525
    %v1527 = vpop.f32.mrf.mxu0
    %v1528 = vadd.f32 0.0, %v1527
    %v1529 = vpop.f32.mrf.mxu0
    %1530 = vmatprep.mubr.f32.mxu0 0.0
    %v1531 = vand.u32 %v1371, 4294901760
    %v1532 = vsub.f32 %v1371, %v1531
    %v1533 = vand.u32 %v1532, 4294901760
    %v1534 = vsub.f32 %v1532, %v1533
    %v1535 = vand.u32 %v1534, 4294901760
    %1536 = vmatmul.mubr.f32.gmra.mxu0 %v1535
    %v1537 = vpop.f32.mrf.mxu0
    %v1538 = vadd.f32 0.0, %v1537
    %v1539 = vpop.f32.mrf.mxu0
    %1540 = vmatprep.mubr.f32.mxu0 0.0
    %v1541 = vand.u32 %v1372, 4294901760
    %v1542 = vsub.f32 %v1372, %v1541
    %v1543 = vand.u32 %v1542, 4294901760
    %v1544 = vsub.f32 %v1542, %v1543
    %v1545 = vand.u32 %v1544, 4294901760
    %1546 = vmatmul.mubr.f32.gmra.mxu0 %v1545
    %v1547 = vpop.f32.mrf.mxu0
    %v1548 = vadd.f32 0.0, %v1547
    %v1549 = vpop.f32.mrf.mxu0
    %1550 = vmatprep.mubr.f32.mxu0 0.0
    %v1551 = vand.u32 %v1373, 4294901760
    %v1552 = vsub.f32 %v1373, %v1551
    %v1553 = vand.u32 %v1552, 4294901760
    %v1554 = vsub.f32 %v1552, %v1553
    %v1555 = vand.u32 %v1554, 4294901760
    %1556 = vmatmul.mubr.f32.gmra.mxu0 %v1555
    %v1557 = vpop.f32.mrf.mxu0
    %v1558 = vadd.f32 0.0, %v1557
    %v1559 = vpop.f32.mrf.mxu0
    %1560 = vmatprep.mubr.f32.mxu0 0.0
    %v1561 = vand.u32 %v1374, 4294901760
    %v1562 = vsub.f32 %v1374, %v1561
    %v1563 = vand.u32 %v1562, 4294901760
    %v1564 = vsub.f32 %v1562, %v1563
    %v1565 = vand.u32 %v1564, 4294901760
    %1566 = vmatmul.mubr.f32.gmra.mxu0 %v1565
    %v1567 = vpop.f32.mrf.mxu0
    %v1568 = vadd.f32 0.0, %v1567
    %v1569 = vpop.f32.mrf.mxu0
    %1570 = vmatprep.mubr.f32.mxu0 0.0
    %v1571 = vand.u32 %v1375, 4294901760
    %v1572 = vsub.f32 %v1375, %v1571
    %v1573 = vand.u32 %v1572, 4294901760
    %v1574 = vsub.f32 %v1572, %v1573
    %v1575 = vand.u32 %v1574, 4294901760
    %1576 = vmatmul.mubr.f32.gmra.mxu0 %v1575
    %v1577 = vpop.f32.mrf.mxu0
    %v1578 = vadd.f32 0.0, %v1577
    %v1579 = vpop.f32.mrf.mxu0
    %1580 = vmatprep.mubr.f32.mxu0 0.0
    %v1581 = vand.u32 %v1376, 4294901760
    %v1582 = vsub.f32 %v1376, %v1581
    %v1583 = vand.u32 %v1582, 4294901760
    %v1584 = vsub.f32 %v1582, %v1583
    %v1585 = vand.u32 %v1584, 4294901760
    %1586 = vmatmul.mubr.f32.gmra.mxu0 %v1585
    %v1587 = vpop.f32.mrf.mxu0
    %v1588 = vadd.f32 0.0, %v1587
    %v1589 = vpop.f32.mrf.mxu0
    %1590 = vmatprep.mubr.f32.mxu0 0.0
    %v1591 = vand.u32 %v1377, 4294901760
    %v1592 = vsub.f32 %v1377, %v1591
    %v1593 = vand.u32 %v1592, 4294901760
    %v1594 = vsub.f32 %v1592, %v1593
    %v1595 = vand.u32 %v1594, 4294901760
    %1596 = vmatmul.mubr.f32.gmra.mxu0 %v1595
    %v1597 = vpop.f32.mrf.mxu0
    %v1598 = vadd.f32 0.0, %v1597
    %v1599 = vpop.f32.mrf.mxu0
    %1600 = vmatprep.mubr.f32.mxu0 0.0
    %v1601 = vand.u32 %v1378, 4294901760
    %v1602 = vsub.f32 %v1378, %v1601
    %v1603 = vand.u32 %v1602, 4294901760
    %v1604 = vsub.f32 %v1602, %v1603
    %v1605 = vand.u32 %v1604, 4294901760
    %1606 = vmatmul.mubr.f32.gmra.mxu0 %v1605
    %v1607 = vpop.f32.mrf.mxu0
    %v1608 = vadd.f32 0.0, %v1607
    %v1609 = vpop.f32.mrf.mxu0
    %1610 = vmatprep.mubr.f32.mxu0 0.0
    %v1611 = vand.u32 %v1379, 4294901760
    %v1612 = vsub.f32 %v1379, %v1611
    %v1613 = vand.u32 %v1612, 4294901760
    %v1614 = vsub.f32 %v1612, %v1613
    %v1615 = vand.u32 %v1614, 4294901760
    %1616 = vmatmul.mubr.f32.gmra.mxu0 %v1615
    %v1617 = vpop.f32.mrf.mxu0
    %v1618 = vadd.f32 0.0, %v1617
    %v1619 = vpop.f32.mrf.mxu0
    %1620 = vdwg.mxu0
    %1621 = vmatprep.subr.mxu0 0.0
    %v1622 = vand.u32 %v77, 4294901760
    %v1623 = vsub.f32 %v77, %v1622
    %v1624 = vand.u32 %v1623, 4294901760
    %v1625 = vsub.f32 %v1623, %v1624
    %v1626 = vand.u32 %v1625, 4294901760
    %1627 = vmatpush1.msra.mxu0 %v1626
    %1628 = vmatprep.subr.mxu0 0.0
    %v1629 = vand.u32 %v76, 4294901760
    %v1630 = vsub.f32 %v76, %v1629
    %v1631 = vand.u32 %v1630, 4294901760
    %v1632 = vsub.f32 %v1630, %v1631
    %v1633 = vand.u32 %v1632, 4294901760
    %1634 = vmatpush1.msra.mxu0 %v1633
    %1635 = vmatprep.subr.mxu0 0.0
    %v1636 = vand.u32 %v75, 4294901760
    %v1637 = vsub.f32 %v75, %v1636
    %v1638 = vand.u32 %v1637, 4294901760
    %v1639 = vsub.f32 %v1637, %v1638
    %v1640 = vand.u32 %v1639, 4294901760
    %1641 = vmatpush1.msra.mxu0 %v1640
    %1642 = vmatprep.subr.mxu0 0.0
    %v1643 = vand.u32 %v74, 4294901760
    %v1644 = vsub.f32 %v74, %v1643
    %v1645 = vand.u32 %v1644, 4294901760
    %v1646 = vsub.f32 %v1644, %v1645
    %v1647 = vand.u32 %v1646, 4294901760
    %1648 = vmatpush1.msra.mxu0 %v1647
    %1649 = vmatprep.subr.mxu0 0.0
    %v1650 = vand.u32 %v73, 4294901760
    %v1651 = vsub.f32 %v73, %v1650
    %v1652 = vand.u32 %v1651, 4294901760
    %v1653 = vsub.f32 %v1651, %v1652
    %v1654 = vand.u32 %v1653, 4294901760
    %1655 = vmatpush1.msra.mxu0 %v1654
    %1656 = vmatprep.subr.mxu0 0.0
    %v1657 = vand.u32 %v72, 4294901760
    %v1658 = vsub.f32 %v72, %v1657
    %v1659 = vand.u32 %v1658, 4294901760
    %v1660 = vsub.f32 %v1658, %v1659
    %v1661 = vand.u32 %v1660, 4294901760
    %1662 = vmatpush1.msra.mxu0 %v1661
    %1663 = vmatprep.subr.mxu0 0.0
    %v1664 = vand.u32 %v71, 4294901760
    %v1665 = vsub.f32 %v71, %v1664
    %v1666 = vand.u32 %v1665, 4294901760
    %v1667 = vsub.f32 %v1665, %v1666
    %v1668 = vand.u32 %v1667, 4294901760
    %1669 = vmatpush1.msra.mxu0 %v1668
    %1670 = vmatprep.subr.mxu0 0.0
    %v1671 = vand.u32 %v70, 4294901760
    %v1672 = vsub.f32 %v70, %v1671
    %v1673 = vand.u32 %v1672, 4294901760
    %v1674 = vsub.f32 %v1672, %v1673
    %v1675 = vand.u32 %v1674, 4294901760
    %1676 = vmatpush1.msra.mxu0 %v1675
    %1677 = vmatprep.subr.mxu0 0.0
    %v1678 = vand.u32 %v69, 4294901760
    %v1679 = vsub.f32 %v69, %v1678
    %v1680 = vand.u32 %v1679, 4294901760
    %v1681 = vsub.f32 %v1679, %v1680
    %v1682 = vand.u32 %v1681, 4294901760
    %1683 = vmatpush1.msra.mxu0 %v1682
    %1684 = vmatprep.subr.mxu0 0.0
    %v1685 = vand.u32 %v68, 4294901760
    %v1686 = vsub.f32 %v68, %v1685
    %v1687 = vand.u32 %v1686, 4294901760
    %v1688 = vsub.f32 %v1686, %v1687
    %v1689 = vand.u32 %v1688, 4294901760
    %1690 = vmatpush1.msra.mxu0 %v1689
    %1691 = vmatprep.subr.mxu0 0.0
    %v1692 = vand.u32 %v67, 4294901760
    %v1693 = vsub.f32 %v67, %v1692
    %v1694 = vand.u32 %v1693, 4294901760
    %v1695 = vsub.f32 %v1693, %v1694
    %v1696 = vand.u32 %v1695, 4294901760
    %1697 = vmatpush1.msra.mxu0 %v1696
    %1698 = vmatprep.subr.mxu0 0.0
    %v1699 = vand.u32 %v66, 4294901760
    %v1700 = vsub.f32 %v66, %v1699
    %v1701 = vand.u32 %v1700, 4294901760
    %v1702 = vsub.f32 %v1700, %v1701
    %v1703 = vand.u32 %v1702, 4294901760
    %1704 = vmatpush1.msra.mxu0 %v1703
    %1705 = vmatprep.subr.mxu0 0.0
    %v1706 = vand.u32 %v65, 4294901760
    %v1707 = vsub.f32 %v65, %v1706
    %v1708 = vand.u32 %v1707, 4294901760
    %v1709 = vsub.f32 %v1707, %v1708
    %v1710 = vand.u32 %v1709, 4294901760
    %1711 = vmatpush1.msra.mxu0 %v1710
    %1712 = vmatprep.subr.mxu0 0.0
    %v1713 = vand.u32 %v64, 4294901760
    %v1714 = vsub.f32 %v64, %v1713
    %v1715 = vand.u32 %v1714, 4294901760
    %v1716 = vsub.f32 %v1714, %v1715
    %v1717 = vand.u32 %v1716, 4294901760
    %1718 = vmatpush1.msra.mxu0 %v1717
    %1719 = vmatprep.subr.mxu0 0.0
    %v1720 = vand.u32 %v63, 4294901760
    %v1721 = vsub.f32 %v63, %v1720
    %v1722 = vand.u32 %v1721, 4294901760
    %v1723 = vsub.f32 %v1721, %v1722
    %v1724 = vand.u32 %v1723, 4294901760
    %1725 = vmatpush1.msra.mxu0 %v1724
    %1726 = vmatprep.subr.mxu0 0.0
    %v1727 = vand.u32 %v62, 4294901760
    %v1728 = vsub.f32 %v62, %v1727
    %v1729 = vand.u32 %v1728, 4294901760
    %v1730 = vsub.f32 %v1728, %v1729
    %v1731 = vand.u32 %v1730, 4294901760
    %1732 = vmatpush1.msra.mxu0 %v1731
    %1733 = vmatprep.subr.mxu0 0.0
    %1734 = vmatpush2.msra.mxu0 0.0
    %1735 = vmatprep.subr.mxu0 0.0
    %1736 = vmatpush2.msra.mxu0 0.0
    %1737 = vmatprep.subr.mxu0 0.0
    %1738 = vmatpush2.msra.mxu0 0.0
    %1739 = vmatprep.subr.mxu0 0.0
    %1740 = vmatpush2.msra.mxu0 0.0
    %1741 = vmatprep.subr.mxu0 0.0
    %1742 = vmatpush2.msra.mxu0 0.0
    %1743 = vmatprep.subr.mxu0 0.0
    %1744 = vmatpush2.msra.mxu0 0.0
    %1745 = vmatprep.subr.mxu0 0.0
    %1746 = vmatpush2.msra.mxu0 0.0
    %1747 = vmatprep.subr.mxu0 0.0
    %1748 = vmatpush2.msra.mxu0 0.0
    %1749 = vmatprep.subr.mxu0 0.0
    %1750 = vmatpush2.msra.mxu0 0.0
    %1751 = vmatprep.subr.mxu0 0.0
    %1752 = vmatpush2.msra.mxu0 0.0
    %1753 = vmatprep.subr.mxu0 0.0
    %1754 = vmatpush2.msra.mxu0 0.0
    %1755 = vmatprep.subr.mxu0 0.0
    %1756 = vmatpush2.msra.mxu0 0.0
    %1757 = vmatprep.subr.mxu0 0.0
    %1758 = vmatpush2.msra.mxu0 0.0
    %1759 = vmatprep.subr.mxu0 0.0
    %1760 = vmatpush2.msra.mxu0 0.0
    %1761 = vmatprep.subr.mxu0 0.0
    %1762 = vmatpush2.msra.mxu0 0.0
    %1763 = vmatprep.subr.mxu0 0.0
    %1764 = vmatpush2.msra.mxu0 0.0
    %1765 = vmatprep.mubr.f32.mxu0 0.0
    %v1766 = vand.u32 %v1364, 4294901760
    %1767 = vmatmul.mubr.f32.gmra.mxu0 %v1766
    %v1768 = vpop.f32.mrf.mxu0
    %v1769 = vadd.f32 %v1468, %v1768
    %v1770 = vpop.f32.mrf.mxu0
    %1771 = vmatprep.mubr.f32.mxu0 0.0
    %v1772 = vand.u32 %v1365, 4294901760
    %1773 = vmatmul.mubr.f32.gmra.mxu0 %v1772
    %v1774 = vpop.f32.mrf.mxu0
    %v1775 = vadd.f32 %v1478, %v1774
    %v1776 = vpop.f32.mrf.mxu0
    %1777 = vmatprep.mubr.f32.mxu0 0.0
    %v1778 = vand.u32 %v1366, 4294901760
    %1779 = vmatmul.mubr.f32.gmra.mxu0 %v1778
    %v1780 = vpop.f32.mrf.mxu0
    %v1781 = vadd.f32 %v1488, %v1780
    %v1782 = vpop.f32.mrf.mxu0
    %1783 = vmatprep.mubr.f32.mxu0 0.0
    %v1784 = vand.u32 %v1367, 4294901760
    %1785 = vmatmul.mubr.f32.gmra.mxu0 %v1784
    %v1786 = vpop.f32.mrf.mxu0
    %v1787 = vadd.f32 %v1498, %v1786
    %v1788 = vpop.f32.mrf.mxu0
    %1789 = vmatprep.mubr.f32.mxu0 0.0
    %v1790 = vand.u32 %v1368, 4294901760
    %1791 = vmatmul.mubr.f32.gmra.mxu0 %v1790
    %v1792 = vpop.f32.mrf.mxu0
    %v1793 = vadd.f32 %v1508, %v1792
    %v1794 = vpop.f32.mrf.mxu0
    %1795 = vmatprep.mubr.f32.mxu0 0.0
    %v1796 = vand.u32 %v1369, 4294901760
    %1797 = vmatmul.mubr.f32.gmra.mxu0 %v1796
    %v1798 = vpop.f32.mrf.mxu0
    %v1799 = vadd.f32 %v1518, %v1798
    %v1800 = vpop.f32.mrf.mxu0
    %1801 = vmatprep.mubr.f32.mxu0 0.0
    %v1802 = vand.u32 %v1370, 4294901760
    %1803 = vmatmul.mubr.f32.gmra.mxu0 %v1802
    %v1804 = vpop.f32.mrf.mxu0
    %v1805 = vadd.f32 %v1528, %v1804
    %v1806 = vpop.f32.mrf.mxu0
    %1807 = vmatprep.mubr.f32.mxu0 0.0
    %v1808 = vand.u32 %v1371, 4294901760
    %1809 = vmatmul.mubr.f32.gmra.mxu0 %v1808
    %v1810 = vpop.f32.mrf.mxu0
    %v1811 = vadd.f32 %v1538, %v1810
    %v1812 = vpop.f32.mrf.mxu0
    %1813 = vmatprep.mubr.f32.mxu0 0.0
    %v1814 = vand.u32 %v1372, 4294901760
    %1815 = vmatmul.mubr.f32.gmra.mxu0 %v1814
    %v1816 = vpop.f32.mrf.mxu0
    %v1817 = vadd.f32 %v1548, %v1816
    %v1818 = vpop.f32.mrf.mxu0
    %1819 = vmatprep.mubr.f32.mxu0 0.0
    %v1820 = vand.u32 %v1373, 4294901760
    %1821 = vmatmul.mubr.f32.gmra.mxu0 %v1820
    %v1822 = vpop.f32.mrf.mxu0
    %v1823 = vadd.f32 %v1558, %v1822
    %v1824 = vpop.f32.mrf.mxu0
    %1825 = vmatprep.mubr.f32.mxu0 0.0
    %v1826 = vand.u32 %v1374, 4294901760
    %1827 = vmatmul.mubr.f32.gmra.mxu0 %v1826
    %v1828 = vpop.f32.mrf.mxu0
    %v1829 = vadd.f32 %v1568, %v1828
    %v1830 = vpop.f32.mrf.mxu0
    %1831 = vmatprep.mubr.f32.mxu0 0.0
    %v1832 = vand.u32 %v1375, 4294901760
    %1833 = vmatmul.mubr.f32.gmra.mxu0 %v1832
    %v1834 = vpop.f32.mrf.mxu0
    %v1835 = vadd.f32 %v1578, %v1834
    %v1836 = vpop.f32.mrf.mxu0
    %1837 = vmatprep.mubr.f32.mxu0 0.0
    %v1838 = vand.u32 %v1376, 4294901760
    %1839 = vmatmul.mubr.f32.gmra.mxu0 %v1838
    %v1840 = vpop.f32.mrf.mxu0
    %v1841 = vadd.f32 %v1588, %v1840
    %v1842 = vpop.f32.mrf.mxu0
    %1843 = vmatprep.mubr.f32.mxu0 0.0
    %v1844 = vand.u32 %v1377, 4294901760
    %1845 = vmatmul.mubr.f32.gmra.mxu0 %v1844
    %v1846 = vpop.f32.mrf.mxu0
    %v1847 = vadd.f32 %v1598, %v1846
    %v1848 = vpop.f32.mrf.mxu0
    %1849 = vmatprep.mubr.f32.mxu0 0.0
    %v1850 = vand.u32 %v1378, 4294901760
    %1851 = vmatmul.mubr.f32.gmra.mxu0 %v1850
    %v1852 = vpop.f32.mrf.mxu0
    %v1853 = vadd.f32 %v1608, %v1852
    %v1854 = vpop.f32.mrf.mxu0
    %1855 = vmatprep.mubr.f32.mxu0 0.0
    %v1856 = vand.u32 %v1379, 4294901760
    %1857 = vmatmul.mubr.f32.gmra.mxu0 %v1856
    %v1858 = vpop.f32.mrf.mxu0
    %v1859 = vadd.f32 %v1618, %v1858
    %v1860 = vpop.f32.mrf.mxu0
    %1861 = vdwg.mxu0
    %1862 = vmatprep.subr.mxu0 0.0
    %v1863 = vand.u32 %v77, 4294901760
    %v1864 = vsub.f32 %v77, %v1863
    %1865 = vmatpush1.msra.mxu0 %v1864
    %1866 = vmatprep.subr.mxu0 0.0
    %v1867 = vand.u32 %v76, 4294901760
    %v1868 = vsub.f32 %v76, %v1867
    %1869 = vmatpush1.msra.mxu0 %v1868
    %1870 = vmatprep.subr.mxu0 0.0
    %v1871 = vand.u32 %v75, 4294901760
    %v1872 = vsub.f32 %v75, %v1871
    %1873 = vmatpush1.msra.mxu0 %v1872
    %1874 = vmatprep.subr.mxu0 0.0
    %v1875 = vand.u32 %v74, 4294901760
    %v1876 = vsub.f32 %v74, %v1875
    %1877 = vmatpush1.msra.mxu0 %v1876
    %1878 = vmatprep.subr.mxu0 0.0
    %v1879 = vand.u32 %v73, 4294901760
    %v1880 = vsub.f32 %v73, %v1879
    %1881 = vmatpush1.msra.mxu0 %v1880
    %1882 = vmatprep.subr.mxu0 0.0
    %v1883 = vand.u32 %v72, 4294901760
    %v1884 = vsub.f32 %v72, %v1883
    %1885 = vmatpush1.msra.mxu0 %v1884
    %1886 = vmatprep.subr.mxu0 0.0
    %v1887 = vand.u32 %v71, 4294901760
    %v1888 = vsub.f32 %v71, %v1887
    %1889 = vmatpush1.msra.mxu0 %v1888
    %1890 = vmatprep.subr.mxu0 0.0
    %v1891 = vand.u32 %v70, 4294901760
    %v1892 = vsub.f32 %v70, %v1891
    %1893 = vmatpush1.msra.mxu0 %v1892
    %1894 = vmatprep.subr.mxu0 0.0
    %v1895 = vand.u32 %v69, 4294901760
    %v1896 = vsub.f32 %v69, %v1895
    %1897 = vmatpush1.msra.mxu0 %v1896
    %1898 = vmatprep.subr.mxu0 0.0
    %v1899 = vand.u32 %v68, 4294901760
    %v1900 = vsub.f32 %v68, %v1899
    %1901 = vmatpush1.msra.mxu0 %v1900
    %1902 = vmatprep.subr.mxu0 0.0
    %v1903 = vand.u32 %v67, 4294901760
    %v1904 = vsub.f32 %v67, %v1903
    %1905 = vmatpush1.msra.mxu0 %v1904
    %1906 = vmatprep.subr.mxu0 0.0
    %v1907 = vand.u32 %v66, 4294901760
    %v1908 = vsub.f32 %v66, %v1907
    %1909 = vmatpush1.msra.mxu0 %v1908
    %1910 = vmatprep.subr.mxu0 0.0
    %v1911 = vand.u32 %v65, 4294901760
    %v1912 = vsub.f32 %v65, %v1911
    %1913 = vmatpush1.msra.mxu0 %v1912
    %1914 = vmatprep.subr.mxu0 0.0
    %v1915 = vand.u32 %v64, 4294901760
    %v1916 = vsub.f32 %v64, %v1915
    %1917 = vmatpush1.msra.mxu0 %v1916
    %1918 = vmatprep.subr.mxu0 0.0
    %v1919 = vand.u32 %v63, 4294901760
    %v1920 = vsub.f32 %v63, %v1919
    %1921 = vmatpush1.msra.mxu0 %v1920
    %1922 = vmatprep.subr.mxu0 0.0
    %v1923 = vand.u32 %v62, 4294901760
    %v1924 = vsub.f32 %v62, %v1923
    %1925 = vmatpush1.msra.mxu0 %v1924
    %1926 = vmatprep.subr.mxu0 0.0
    %1927 = vmatpush2.msra.mxu0 0.0
    %1928 = vmatprep.subr.mxu0 0.0
    %1929 = vmatpush2.msra.mxu0 0.0
    %1930 = vmatprep.subr.mxu0 0.0
    %1931 = vmatpush2.msra.mxu0 0.0
    %1932 = vmatprep.subr.mxu0 0.0
    %1933 = vmatpush2.msra.mxu0 0.0
    %1934 = vmatprep.subr.mxu0 0.0
    %1935 = vmatpush2.msra.mxu0 0.0
    %1936 = vmatprep.subr.mxu0 0.0
    %1937 = vmatpush2.msra.mxu0 0.0
    %1938 = vmatprep.subr.mxu0 0.0
    %1939 = vmatpush2.msra.mxu0 0.0
    %1940 = vmatprep.subr.mxu0 0.0
    %1941 = vmatpush2.msra.mxu0 0.0
    %1942 = vmatprep.subr.mxu0 0.0
    %1943 = vmatpush2.msra.mxu0 0.0
    %1944 = vmatprep.subr.mxu0 0.0
    %1945 = vmatpush2.msra.mxu0 0.0
    %1946 = vmatprep.subr.mxu0 0.0
    %1947 = vmatpush2.msra.mxu0 0.0
    %1948 = vmatprep.subr.mxu0 0.0
    %1949 = vmatpush2.msra.mxu0 0.0
    %1950 = vmatprep.subr.mxu0 0.0
    %1951 = vmatpush2.msra.mxu0 0.0
    %1952 = vmatprep.subr.mxu0 0.0
    %1953 = vmatpush2.msra.mxu0 0.0
    %1954 = vmatprep.subr.mxu0 0.0
    %1955 = vmatpush2.msra.mxu0 0.0
    %1956 = vmatprep.subr.mxu0 0.0
    %1957 = vmatpush2.msra.mxu0 0.0
    %1958 = vmatprep.mubr.f32.mxu0 0.0
    %v1959 = vand.u32 %v1364, 4294901760
    %v1960 = vsub.f32 %v1364, %v1959
    %1961 = vmatmul.mubr.f32.gmra.mxu0 %v1960
    %v1962 = vpop.f32.mrf.mxu0
    %v1963 = vadd.f32 %v1769, %v1962
    %v1964 = vpop.f32.mrf.mxu0
    %1965 = vmatprep.mubr.f32.mxu0 0.0
    %v1966 = vand.u32 %v1365, 4294901760
    %v1967 = vsub.f32 %v1365, %v1966
    %1968 = vmatmul.mubr.f32.gmra.mxu0 %v1967
    %v1969 = vpop.f32.mrf.mxu0
    %v1970 = vadd.f32 %v1775, %v1969
    %v1971 = vpop.f32.mrf.mxu0
    %1972 = vmatprep.mubr.f32.mxu0 0.0
    %v1973 = vand.u32 %v1366, 4294901760
    %v1974 = vsub.f32 %v1366, %v1973
    %1975 = vmatmul.mubr.f32.gmra.mxu0 %v1974
    %v1976 = vpop.f32.mrf.mxu0
    %v1977 = vadd.f32 %v1781, %v1976
    %v1978 = vpop.f32.mrf.mxu0
    %1979 = vmatprep.mubr.f32.mxu0 0.0
    %v1980 = vand.u32 %v1367, 4294901760
    %v1981 = vsub.f32 %v1367, %v1980
    %1982 = vmatmul.mubr.f32.gmra.mxu0 %v1981
    %v1983 = vpop.f32.mrf.mxu0
    %v1984 = vadd.f32 %v1787, %v1983
    %v1985 = vpop.f32.mrf.mxu0
    %1986 = vmatprep.mubr.f32.mxu0 0.0
    %v1987 = vand.u32 %v1368, 4294901760
    %v1988 = vsub.f32 %v1368, %v1987
    %1989 = vmatmul.mubr.f32.gmra.mxu0 %v1988
    %v1990 = vpop.f32.mrf.mxu0
    %v1991 = vadd.f32 %v1793, %v1990
    %v1992 = vpop.f32.mrf.mxu0
    %1993 = vmatprep.mubr.f32.mxu0 0.0
    %v1994 = vand.u32 %v1369, 4294901760
    %v1995 = vsub.f32 %v1369, %v1994
    %1996 = vmatmul.mubr.f32.gmra.mxu0 %v1995
    %v1997 = vpop.f32.mrf.mxu0
    %v1998 = vadd.f32 %v1799, %v1997
    %v1999 = vpop.f32.mrf.mxu0
    %2000 = vmatprep.mubr.f32.mxu0 0.0
    %v2001 = vand.u32 %v1370, 4294901760
    %v2002 = vsub.f32 %v1370, %v2001
    %2003 = vmatmul.mubr.f32.gmra.mxu0 %v2002
    %v2004 = vpop.f32.mrf.mxu0
    %v2005 = vadd.f32 %v1805, %v2004
    %v2006 = vpop.f32.mrf.mxu0
    %2007 = vmatprep.mubr.f32.mxu0 0.0
    %v2008 = vand.u32 %v1371, 4294901760
    %v2009 = vsub.f32 %v1371, %v2008
    %2010 = vmatmul.mubr.f32.gmra.mxu0 %v2009
    %v2011 = vpop.f32.mrf.mxu0
    %v2012 = vadd.f32 %v1811, %v2011
    %v2013 = vpop.f32.mrf.mxu0
    %2014 = vmatprep.mubr.f32.mxu0 0.0
    %v2015 = vand.u32 %v1372, 4294901760
    %v2016 = vsub.f32 %v1372, %v2015
    %2017 = vmatmul.mubr.f32.gmra.mxu0 %v2016
    %v2018 = vpop.f32.mrf.mxu0
    %v2019 = vadd.f32 %v1817, %v2018
    %v2020 = vpop.f32.mrf.mxu0
    %2021 = vmatprep.mubr.f32.mxu0 0.0
    %v2022 = vand.u32 %v1373, 4294901760
    %v2023 = vsub.f32 %v1373, %v2022
    %2024 = vmatmul.mubr.f32.gmra.mxu0 %v2023
    %v2025 = vpop.f32.mrf.mxu0
    %v2026 = vadd.f32 %v1823, %v2025
    %v2027 = vpop.f32.mrf.mxu0
    %2028 = vmatprep.mubr.f32.mxu0 0.0
    %v2029 = vand.u32 %v1374, 4294901760
    %v2030 = vsub.f32 %v1374, %v2029
    %2031 = vmatmul.mubr.f32.gmra.mxu0 %v2030
    %v2032 = vpop.f32.mrf.mxu0
    %v2033 = vadd.f32 %v1829, %v2032
    %v2034 = vpop.f32.mrf.mxu0
    %2035 = vmatprep.mubr.f32.mxu0 0.0
    %v2036 = vand.u32 %v1375, 4294901760
    %v2037 = vsub.f32 %v1375, %v2036
    %2038 = vmatmul.mubr.f32.gmra.mxu0 %v2037
    %v2039 = vpop.f32.mrf.mxu0
    %v2040 = vadd.f32 %v1835, %v2039
    %v2041 = vpop.f32.mrf.mxu0
    %2042 = vmatprep.mubr.f32.mxu0 0.0
    %v2043 = vand.u32 %v1376, 4294901760
    %v2044 = vsub.f32 %v1376, %v2043
    %2045 = vmatmul.mubr.f32.gmra.mxu0 %v2044
    %v2046 = vpop.f32.mrf.mxu0
    %v2047 = vadd.f32 %v1841, %v2046
    %v2048 = vpop.f32.mrf.mxu0
    %2049 = vmatprep.mubr.f32.mxu0 0.0
    %v2050 = vand.u32 %v1377, 4294901760
    %v2051 = vsub.f32 %v1377, %v2050
    %2052 = vmatmul.mubr.f32.gmra.mxu0 %v2051
    %v2053 = vpop.f32.mrf.mxu0
    %v2054 = vadd.f32 %v1847, %v2053
    %v2055 = vpop.f32.mrf.mxu0
    %2056 = vmatprep.mubr.f32.mxu0 0.0
    %v2057 = vand.u32 %v1378, 4294901760
    %v2058 = vsub.f32 %v1378, %v2057
    %2059 = vmatmul.mubr.f32.gmra.mxu0 %v2058
    %v2060 = vpop.f32.mrf.mxu0
    %v2061 = vadd.f32 %v1853, %v2060
    %v2062 = vpop.f32.mrf.mxu0
    %2063 = vmatprep.mubr.f32.mxu0 0.0
    %v2064 = vand.u32 %v1379, 4294901760
    %v2065 = vsub.f32 %v1379, %v2064
    %2066 = vmatmul.mubr.f32.gmra.mxu0 %v2065
    %v2067 = vpop.f32.mrf.mxu0
    %v2068 = vadd.f32 %v1859, %v2067
    %v2069 = vpop.f32.mrf.mxu0
    %2070 = vdwg.mxu0
    %2071 = vmatprep.subr.mxu0 0.0
    %v2072 = vand.u32 %v77, 4294901760
    %2073 = vmatpush1.msra.mxu0 %v2072
    %2074 = vmatprep.subr.mxu0 0.0
    %v2075 = vand.u32 %v76, 4294901760
    %2076 = vmatpush1.msra.mxu0 %v2075
    %2077 = vmatprep.subr.mxu0 0.0
    %v2078 = vand.u32 %v75, 4294901760
    %2079 = vmatpush1.msra.mxu0 %v2078
    %2080 = vmatprep.subr.mxu0 0.0
    %v2081 = vand.u32 %v74, 4294901760
    %2082 = vmatpush1.msra.mxu0 %v2081
    %2083 = vmatprep.subr.mxu0 0.0
    %v2084 = vand.u32 %v73, 4294901760
    %2085 = vmatpush1.msra.mxu0 %v2084
    %2086 = vmatprep.subr.mxu0 0.0
    %v2087 = vand.u32 %v72, 4294901760
    %2088 = vmatpush1.msra.mxu0 %v2087
    %2089 = vmatprep.subr.mxu0 0.0
    %v2090 = vand.u32 %v71, 4294901760
    %2091 = vmatpush1.msra.mxu0 %v2090
    %2092 = vmatprep.subr.mxu0 0.0
    %v2093 = vand.u32 %v70, 4294901760
    %2094 = vmatpush1.msra.mxu0 %v2093
    %2095 = vmatprep.subr.mxu0 0.0
    %v2096 = vand.u32 %v69, 4294901760
    %2097 = vmatpush1.msra.mxu0 %v2096
    %2098 = vmatprep.subr.mxu0 0.0
    %v2099 = vand.u32 %v68, 4294901760
    %2100 = vmatpush1.msra.mxu0 %v2099
    %2101 = vmatprep.subr.mxu0 0.0
    %v2102 = vand.u32 %v67, 4294901760
    %2103 = vmatpush1.msra.mxu0 %v2102
    %2104 = vmatprep.subr.mxu0 0.0
    %v2105 = vand.u32 %v66, 4294901760
    %2106 = vmatpush1.msra.mxu0 %v2105
    %2107 = vmatprep.subr.mxu0 0.0
    %v2108 = vand.u32 %v65, 4294901760
    %2109 = vmatpush1.msra.mxu0 %v2108
    %2110 = vmatprep.subr.mxu0 0.0
    %v2111 = vand.u32 %v64, 4294901760
    %2112 = vmatpush1.msra.mxu0 %v2111
    %2113 = vmatprep.subr.mxu0 0.0
    %v2114 = vand.u32 %v63, 4294901760
    %2115 = vmatpush1.msra.mxu0 %v2114
    %2116 = vmatprep.subr.mxu0 0.0
    %v2117 = vand.u32 %v62, 4294901760
    %2118 = vmatpush1.msra.mxu0 %v2117
    %2119 = vmatprep.subr.mxu0 0.0
    %2120 = vmatpush2.msra.mxu0 0.0
    %2121 = vmatprep.subr.mxu0 0.0
    %2122 = vmatpush2.msra.mxu0 0.0
    %2123 = vmatprep.subr.mxu0 0.0
    %2124 = vmatpush2.msra.mxu0 0.0
    %2125 = vmatprep.subr.mxu0 0.0
    %2126 = vmatpush2.msra.mxu0 0.0
    %2127 = vmatprep.subr.mxu0 0.0
    %2128 = vmatpush2.msra.mxu0 0.0
    %2129 = vmatprep.subr.mxu0 0.0
    %2130 = vmatpush2.msra.mxu0 0.0
    %2131 = vmatprep.subr.mxu0 0.0
    %2132 = vmatpush2.msra.mxu0 0.0
    %2133 = vmatprep.subr.mxu0 0.0
    %2134 = vmatpush2.msra.mxu0 0.0
    %2135 = vmatprep.subr.mxu0 0.0
    %2136 = vmatpush2.msra.mxu0 0.0
    %2137 = vmatprep.subr.mxu0 0.0
    %2138 = vmatpush2.msra.mxu0 0.0
    %2139 = vmatprep.subr.mxu0 0.0
    %2140 = vmatpush2.msra.mxu0 0.0
    %2141 = vmatprep.subr.mxu0 0.0
    %2142 = vmatpush2.msra.mxu0 0.0
    %2143 = vmatprep.subr.mxu0 0.0
    %2144 = vmatpush2.msra.mxu0 0.0
    %2145 = vmatprep.subr.mxu0 0.0
    %2146 = vmatpush2.msra.mxu0 0.0
    %2147 = vmatprep.subr.mxu0 0.0
    %2148 = vmatpush2.msra.mxu0 0.0
    %2149 = vmatprep.subr.mxu0 0.0
    %2150 = vmatpush2.msra.mxu0 0.0
    %2151 = vmatprep.mubr.f32.mxu0 0.0
    %v2152 = vand.u32 %v1364, 4294901760
    %v2153 = vsub.f32 %v1364, %v2152
    %v2154 = vand.u32 %v2153, 4294901760
    %2155 = vmatmul.mubr.f32.gmra.mxu0 %v2154
    %v2156 = vpop.f32.mrf.mxu0
    %v2157 = vadd.f32 %v1963, %v2156
    %v2158 = vpop.f32.mrf.mxu0
    %2159 = vmatprep.mubr.f32.mxu0 0.0
    %v2160 = vand.u32 %v1365, 4294901760
    %v2161 = vsub.f32 %v1365, %v2160
    %v2162 = vand.u32 %v2161, 4294901760
    %2163 = vmatmul.mubr.f32.gmra.mxu0 %v2162
    %v2164 = vpop.f32.mrf.mxu0
    %v2165 = vadd.f32 %v1970, %v2164
    %v2166 = vpop.f32.mrf.mxu0
    %2167 = vmatprep.mubr.f32.mxu0 0.0
    %v2168 = vand.u32 %v1366, 4294901760
    %v2169 = vsub.f32 %v1366, %v2168
    %v2170 = vand.u32 %v2169, 4294901760
    %2171 = vmatmul.mubr.f32.gmra.mxu0 %v2170
    %v2172 = vpop.f32.mrf.mxu0
    %v2173 = vadd.f32 %v1977, %v2172
    %v2174 = vpop.f32.mrf.mxu0
    %2175 = vmatprep.mubr.f32.mxu0 0.0
    %v2176 = vand.u32 %v1367, 4294901760
    %v2177 = vsub.f32 %v1367, %v2176
    %v2178 = vand.u32 %v2177, 4294901760
    %2179 = vmatmul.mubr.f32.gmra.mxu0 %v2178
    %v2180 = vpop.f32.mrf.mxu0
    %v2181 = vadd.f32 %v1984, %v2180
    %v2182 = vpop.f32.mrf.mxu0
    %2183 = vmatprep.mubr.f32.mxu0 0.0
    %v2184 = vand.u32 %v1368, 4294901760
    %v2185 = vsub.f32 %v1368, %v2184
    %v2186 = vand.u32 %v2185, 4294901760
    %2187 = vmatmul.mubr.f32.gmra.mxu0 %v2186
    %v2188 = vpop.f32.mrf.mxu0
    %v2189 = vadd.f32 %v1991, %v2188
    %v2190 = vpop.f32.mrf.mxu0
    %2191 = vmatprep.mubr.f32.mxu0 0.0
    %v2192 = vand.u32 %v1369, 4294901760
    %v2193 = vsub.f32 %v1369, %v2192
    %v2194 = vand.u32 %v2193, 4294901760
    %2195 = vmatmul.mubr.f32.gmra.mxu0 %v2194
    %v2196 = vpop.f32.mrf.mxu0
    %v2197 = vadd.f32 %v1998, %v2196
    %v2198 = vpop.f32.mrf.mxu0
    %2199 = vmatprep.mubr.f32.mxu0 0.0
    %v2200 = vand.u32 %v1370, 4294901760
    %v2201 = vsub.f32 %v1370, %v2200
    %v2202 = vand.u32 %v2201, 4294901760
    %2203 = vmatmul.mubr.f32.gmra.mxu0 %v2202
    %v2204 = vpop.f32.mrf.mxu0
    %v2205 = vadd.f32 %v2005, %v2204
    %v2206 = vpop.f32.mrf.mxu0
    %2207 = vmatprep.mubr.f32.mxu0 0.0
    %v2208 = vand.u32 %v1371, 4294901760
    %v2209 = vsub.f32 %v1371, %v2208
    %v2210 = vand.u32 %v2209, 4294901760
    %2211 = vmatmul.mubr.f32.gmra.mxu0 %v2210
    %v2212 = vpop.f32.mrf.mxu0
    %v2213 = vadd.f32 %v2012, %v2212
    %v2214 = vpop.f32.mrf.mxu0
    %2215 = vmatprep.mubr.f32.mxu0 0.0
    %v2216 = vand.u32 %v1372, 4294901760
    %v2217 = vsub.f32 %v1372, %v2216
    %v2218 = vand.u32 %v2217, 4294901760
    %2219 = vmatmul.mubr.f32.gmra.mxu0 %v2218
    %v2220 = vpop.f32.mrf.mxu0
    %v2221 = vadd.f32 %v2019, %v2220
    %v2222 = vpop.f32.mrf.mxu0
    %2223 = vmatprep.mubr.f32.mxu0 0.0
    %v2224 = vand.u32 %v1373, 4294901760
    %v2225 = vsub.f32 %v1373, %v2224
    %v2226 = vand.u32 %v2225, 4294901760
    %2227 = vmatmul.mubr.f32.gmra.mxu0 %v2226
    %v2228 = vpop.f32.mrf.mxu0
    %v2229 = vadd.f32 %v2026, %v2228
    %v2230 = vpop.f32.mrf.mxu0
    %2231 = vmatprep.mubr.f32.mxu0 0.0
    %v2232 = vand.u32 %v1374, 4294901760
    %v2233 = vsub.f32 %v1374, %v2232
    %v2234 = vand.u32 %v2233, 4294901760
    %2235 = vmatmul.mubr.f32.gmra.mxu0 %v2234
    %v2236 = vpop.f32.mrf.mxu0
    %v2237 = vadd.f32 %v2033, %v2236
    %v2238 = vpop.f32.mrf.mxu0
    %2239 = vmatprep.mubr.f32.mxu0 0.0
    %v2240 = vand.u32 %v1375, 4294901760
    %v2241 = vsub.f32 %v1375, %v2240
    %v2242 = vand.u32 %v2241, 4294901760
    %2243 = vmatmul.mubr.f32.gmra.mxu0 %v2242
    %v2244 = vpop.f32.mrf.mxu0
    %v2245 = vadd.f32 %v2040, %v2244
    %v2246 = vpop.f32.mrf.mxu0
    %2247 = vmatprep.mubr.f32.mxu0 0.0
    %v2248 = vand.u32 %v1376, 4294901760
    %v2249 = vsub.f32 %v1376, %v2248
    %v2250 = vand.u32 %v2249, 4294901760
    %2251 = vmatmul.mubr.f32.gmra.mxu0 %v2250
    %v2252 = vpop.f32.mrf.mxu0
    %v2253 = vadd.f32 %v2047, %v2252
    %v2254 = vpop.f32.mrf.mxu0
    %2255 = vmatprep.mubr.f32.mxu0 0.0
    %v2256 = vand.u32 %v1377, 4294901760
    %v2257 = vsub.f32 %v1377, %v2256
    %v2258 = vand.u32 %v2257, 4294901760
    %2259 = vmatmul.mubr.f32.gmra.mxu0 %v2258
    %v2260 = vpop.f32.mrf.mxu0
    %v2261 = vadd.f32 %v2054, %v2260
    %v2262 = vpop.f32.mrf.mxu0
    %2263 = vmatprep.mubr.f32.mxu0 0.0
    %v2264 = vand.u32 %v1378, 4294901760
    %v2265 = vsub.f32 %v1378, %v2264
    %v2266 = vand.u32 %v2265, 4294901760
    %2267 = vmatmul.mubr.f32.gmra.mxu0 %v2266
    %v2268 = vpop.f32.mrf.mxu0
    %v2269 = vadd.f32 %v2061, %v2268
    %v2270 = vpop.f32.mrf.mxu0
    %2271 = vmatprep.mubr.f32.mxu0 0.0
    %v2272 = vand.u32 %v1379, 4294901760
    %v2273 = vsub.f32 %v1379, %v2272
    %v2274 = vand.u32 %v2273, 4294901760
    %2275 = vmatmul.mubr.f32.gmra.mxu0 %v2274
    %v2276 = vpop.f32.mrf.mxu0
    %v2277 = vadd.f32 %v2068, %v2276
    %v2278 = vpop.f32.mrf.mxu0
    %2279 = vdwg.mxu0
    %2280 = vmatprep.subr.mxu0 0.0
    %v2281 = vand.u32 %v77, 4294901760
    %v2282 = vsub.f32 %v77, %v2281
    %v2283 = vand.u32 %v2282, 4294901760
    %2284 = vmatpush1.msra.mxu0 %v2283
    %2285 = vmatprep.subr.mxu0 0.0
    %v2286 = vand.u32 %v76, 4294901760
    %v2287 = vsub.f32 %v76, %v2286
    %v2288 = vand.u32 %v2287, 4294901760
    %2289 = vmatpush1.msra.mxu0 %v2288
    %2290 = vmatprep.subr.mxu0 0.0
    %v2291 = vand.u32 %v75, 4294901760
    %v2292 = vsub.f32 %v75, %v2291
    %v2293 = vand.u32 %v2292, 4294901760
    %2294 = vmatpush1.msra.mxu0 %v2293
    %2295 = vmatprep.subr.mxu0 0.0
    %v2296 = vand.u32 %v74, 4294901760
    %v2297 = vsub.f32 %v74, %v2296
    %v2298 = vand.u32 %v2297, 4294901760
    %2299 = vmatpush1.msra.mxu0 %v2298
    %2300 = vmatprep.subr.mxu0 0.0
    %v2301 = vand.u32 %v73, 4294901760
    %v2302 = vsub.f32 %v73, %v2301
    %v2303 = vand.u32 %v2302, 4294901760
    %2304 = vmatpush1.msra.mxu0 %v2303
    %2305 = vmatprep.subr.mxu0 0.0
    %v2306 = vand.u32 %v72, 4294901760
    %v2307 = vsub.f32 %v72, %v2306
    %v2308 = vand.u32 %v2307, 4294901760
    %2309 = vmatpush1.msra.mxu0 %v2308
    %2310 = vmatprep.subr.mxu0 0.0
    %v2311 = vand.u32 %v71, 4294901760
    %v2312 = vsub.f32 %v71, %v2311
    %v2313 = vand.u32 %v2312, 4294901760
    %2314 = vmatpush1.msra.mxu0 %v2313
    %2315 = vmatprep.subr.mxu0 0.0
    %v2316 = vand.u32 %v70, 4294901760
    %v2317 = vsub.f32 %v70, %v2316
    %v2318 = vand.u32 %v2317, 4294901760
    %2319 = vmatpush1.msra.mxu0 %v2318
    %2320 = vmatprep.subr.mxu0 0.0
    %v2321 = vand.u32 %v69, 4294901760
    %v2322 = vsub.f32 %v69, %v2321
    %v2323 = vand.u32 %v2322, 4294901760
    %2324 = vmatpush1.msra.mxu0 %v2323
    %2325 = vmatprep.subr.mxu0 0.0
    %v2326 = vand.u32 %v68, 4294901760
    %v2327 = vsub.f32 %v68, %v2326
    %v2328 = vand.u32 %v2327, 4294901760
    %2329 = vmatpush1.msra.mxu0 %v2328
    %2330 = vmatprep.subr.mxu0 0.0
    %v2331 = vand.u32 %v67, 4294901760
    %v2332 = vsub.f32 %v67, %v2331
    %v2333 = vand.u32 %v2332, 4294901760
    %2334 = vmatpush1.msra.mxu0 %v2333
    %2335 = vmatprep.subr.mxu0 0.0
    %v2336 = vand.u32 %v66, 4294901760
    %v2337 = vsub.f32 %v66, %v2336
    %v2338 = vand.u32 %v2337, 4294901760
    %2339 = vmatpush1.msra.mxu0 %v2338
    %2340 = vmatprep.subr.mxu0 0.0
    %v2341 = vand.u32 %v65, 4294901760
    %v2342 = vsub.f32 %v65, %v2341
    %v2343 = vand.u32 %v2342, 4294901760
    %2344 = vmatpush1.msra.mxu0 %v2343
    %2345 = vmatprep.subr.mxu0 0.0
    %v2346 = vand.u32 %v64, 4294901760
    %v2347 = vsub.f32 %v64, %v2346
    %v2348 = vand.u32 %v2347, 4294901760
    %2349 = vmatpush1.msra.mxu0 %v2348
    %2350 = vmatprep.subr.mxu0 0.0
    %v2351 = vand.u32 %v63, 4294901760
    %v2352 = vsub.f32 %v63, %v2351
    %v2353 = vand.u32 %v2352, 4294901760
    %2354 = vmatpush1.msra.mxu0 %v2353
    %2355 = vmatprep.subr.mxu0 0.0
    %v2356 = vand.u32 %v62, 4294901760
    %v2357 = vsub.f32 %v62, %v2356
    %v2358 = vand.u32 %v2357, 4294901760
    %2359 = vmatpush1.msra.mxu0 %v2358
    %2360 = vmatprep.subr.mxu0 0.0
    %2361 = vmatpush2.msra.mxu0 0.0
    %2362 = vmatprep.subr.mxu0 0.0
    %2363 = vmatpush2.msra.mxu0 0.0
    %2364 = vmatprep.subr.mxu0 0.0
    %2365 = vmatpush2.msra.mxu0 0.0
    %2366 = vmatprep.subr.mxu0 0.0
    %2367 = vmatpush2.msra.mxu0 0.0
    %2368 = vmatprep.subr.mxu0 0.0
    %2369 = vmatpush2.msra.mxu0 0.0
    %2370 = vmatprep.subr.mxu0 0.0
    %2371 = vmatpush2.msra.mxu0 0.0
    %2372 = vmatprep.subr.mxu0 0.0
    %2373 = vmatpush2.msra.mxu0 0.0
    %2374 = vmatprep.subr.mxu0 0.0
    %2375 = vmatpush2.msra.mxu0 0.0
    %2376 = vmatprep.subr.mxu0 0.0
    %2377 = vmatpush2.msra.mxu0 0.0
    %2378 = vmatprep.subr.mxu0 0.0
    %2379 = vmatpush2.msra.mxu0 0.0
    %2380 = vmatprep.subr.mxu0 0.0
    %2381 = vmatpush2.msra.mxu0 0.0
    %2382 = vmatprep.subr.mxu0 0.0
    %2383 = vmatpush2.msra.mxu0 0.0
    %2384 = vmatprep.subr.mxu0 0.0
    %2385 = vmatpush2.msra.mxu0 0.0
    %2386 = vmatprep.subr.mxu0 0.0
    %2387 = vmatpush2.msra.mxu0 0.0
    %2388 = vmatprep.subr.mxu0 0.0
    %2389 = vmatpush2.msra.mxu0 0.0
    %2390 = vmatprep.subr.mxu0 0.0
    %2391 = vmatpush2.msra.mxu0 0.0
    %2392 = vmatprep.mubr.f32.mxu0 0.0
    %v2393 = vand.u32 %v1364, 4294901760
    %2394 = vmatmul.mubr.f32.gmra.mxu0 %v2393
    %v2395 = vpop.f32.mrf.mxu0
    %v2396 = vadd.f32 %v2157, %v2395
    %v2397 = vpop.f32.mrf.mxu0
    %2398 = vmatprep.mubr.f32.mxu0 0.0
    %v2399 = vand.u32 %v1365, 4294901760
    %2400 = vmatmul.mubr.f32.gmra.mxu0 %v2399
    %v2401 = vpop.f32.mrf.mxu0
    %v2402 = vadd.f32 %v2165, %v2401
    %v2403 = vpop.f32.mrf.mxu0
    %2404 = vmatprep.mubr.f32.mxu0 0.0
    %v2405 = vand.u32 %v1366, 4294901760
    %2406 = vmatmul.mubr.f32.gmra.mxu0 %v2405
    %v2407 = vpop.f32.mrf.mxu0
    %v2408 = vadd.f32 %v2173, %v2407
    %v2409 = vpop.f32.mrf.mxu0
    %2410 = vmatprep.mubr.f32.mxu0 0.0
    %v2411 = vand.u32 %v1367, 4294901760
    %2412 = vmatmul.mubr.f32.gmra.mxu0 %v2411
    %v2413 = vpop.f32.mrf.mxu0
    %v2414 = vadd.f32 %v2181, %v2413
    %v2415 = vpop.f32.mrf.mxu0
    %2416 = vmatprep.mubr.f32.mxu0 0.0
    %v2417 = vand.u32 %v1368, 4294901760
    %2418 = vmatmul.mubr.f32.gmra.mxu0 %v2417
    %v2419 = vpop.f32.mrf.mxu0
    %v2420 = vadd.f32 %v2189, %v2419
    %v2421 = vpop.f32.mrf.mxu0
    %2422 = vmatprep.mubr.f32.mxu0 0.0
    %v2423 = vand.u32 %v1369, 4294901760
    %2424 = vmatmul.mubr.f32.gmra.mxu0 %v2423
    %v2425 = vpop.f32.mrf.mxu0
    %v2426 = vadd.f32 %v2197, %v2425
    %v2427 = vpop.f32.mrf.mxu0
    %2428 = vmatprep.mubr.f32.mxu0 0.0
    %v2429 = vand.u32 %v1370, 4294901760
    %2430 = vmatmul.mubr.f32.gmra.mxu0 %v2429
    %v2431 = vpop.f32.mrf.mxu0
    %v2432 = vadd.f32 %v2205, %v2431
    %v2433 = vpop.f32.mrf.mxu0
    %2434 = vmatprep.mubr.f32.mxu0 0.0
    %v2435 = vand.u32 %v1371, 4294901760
    %2436 = vmatmul.mubr.f32.gmra.mxu0 %v2435
    %v2437 = vpop.f32.mrf.mxu0
    %v2438 = vadd.f32 %v2213, %v2437
    %v2439 = vpop.f32.mrf.mxu0
    %2440 = vmatprep.mubr.f32.mxu0 0.0
    %v2441 = vand.u32 %v1372, 4294901760
    %2442 = vmatmul.mubr.f32.gmra.mxu0 %v2441
    %v2443 = vpop.f32.mrf.mxu0
    %v2444 = vadd.f32 %v2221, %v2443
    %v2445 = vpop.f32.mrf.mxu0
    %2446 = vmatprep.mubr.f32.mxu0 0.0
    %v2447 = vand.u32 %v1373, 4294901760
    %2448 = vmatmul.mubr.f32.gmra.mxu0 %v2447
    %v2449 = vpop.f32.mrf.mxu0
    %v2450 = vadd.f32 %v2229, %v2449
    %v2451 = vpop.f32.mrf.mxu0
    %2452 = vmatprep.mubr.f32.mxu0 0.0
    %v2453 = vand.u32 %v1374, 4294901760
    %2454 = vmatmul.mubr.f32.gmra.mxu0 %v2453
    %v2455 = vpop.f32.mrf.mxu0
    %v2456 = vadd.f32 %v2237, %v2455
    %v2457 = vpop.f32.mrf.mxu0
    %2458 = vmatprep.mubr.f32.mxu0 0.0
    %v2459 = vand.u32 %v1375, 4294901760
    %2460 = vmatmul.mubr.f32.gmra.mxu0 %v2459
    %v2461 = vpop.f32.mrf.mxu0
    %v2462 = vadd.f32 %v2245, %v2461
    %v2463 = vpop.f32.mrf.mxu0
    %2464 = vmatprep.mubr.f32.mxu0 0.0
    %v2465 = vand.u32 %v1376, 4294901760
    %2466 = vmatmul.mubr.f32.gmra.mxu0 %v2465
    %v2467 = vpop.f32.mrf.mxu0
    %v2468 = vadd.f32 %v2253, %v2467
    %v2469 = vpop.f32.mrf.mxu0
    %2470 = vmatprep.mubr.f32.mxu0 0.0
    %v2471 = vand.u32 %v1377, 4294901760
    %2472 = vmatmul.mubr.f32.gmra.mxu0 %v2471
    %v2473 = vpop.f32.mrf.mxu0
    %v2474 = vadd.f32 %v2261, %v2473
    %v2475 = vpop.f32.mrf.mxu0
    %2476 = vmatprep.mubr.f32.mxu0 0.0
    %v2477 = vand.u32 %v1378, 4294901760
    %2478 = vmatmul.mubr.f32.gmra.mxu0 %v2477
    %v2479 = vpop.f32.mrf.mxu0
    %v2480 = vadd.f32 %v2269, %v2479
    %v2481 = vpop.f32.mrf.mxu0
    %2482 = vmatprep.mubr.f32.mxu0 0.0
    %v2483 = vand.u32 %v1379, 4294901760
    %2484 = vmatmul.mubr.f32.gmra.mxu0 %v2483
    %v2485 = vpop.f32.mrf.mxu0
    %v2486 = vadd.f32 %v2277, %v2485
    %v2487 = vpop.f32.mrf.mxu0
    %2488 = vdwg.mxu0
    %2489 = vmatprep.subr.mxu0 0.0
    %v2490 = vand.u32 %v77, 4294901760
    %2491 = vmatpush1.msra.mxu0 %v2490
    %2492 = vmatprep.subr.mxu0 0.0
    %v2493 = vand.u32 %v76, 4294901760
    %2494 = vmatpush1.msra.mxu0 %v2493
    %2495 = vmatprep.subr.mxu0 0.0
    %v2496 = vand.u32 %v75, 4294901760
    %2497 = vmatpush1.msra.mxu0 %v2496
    %2498 = vmatprep.subr.mxu0 0.0
    %v2499 = vand.u32 %v74, 4294901760
    %2500 = vmatpush1.msra.mxu0 %v2499
    %2501 = vmatprep.subr.mxu0 0.0
    %v2502 = vand.u32 %v73, 4294901760
    %2503 = vmatpush1.msra.mxu0 %v2502
    %2504 = vmatprep.subr.mxu0 0.0
    %v2505 = vand.u32 %v72, 4294901760
    %2506 = vmatpush1.msra.mxu0 %v2505
    %2507 = vmatprep.subr.mxu0 0.0
    %v2508 = vand.u32 %v71, 4294901760
    %2509 = vmatpush1.msra.mxu0 %v2508
    %2510 = vmatprep.subr.mxu0 0.0
    %v2511 = vand.u32 %v70, 4294901760
    %2512 = vmatpush1.msra.mxu0 %v2511
    %2513 = vmatprep.subr.mxu0 0.0
    %v2514 = vand.u32 %v69, 4294901760
    %2515 = vmatpush1.msra.mxu0 %v2514
    %2516 = vmatprep.subr.mxu0 0.0
    %v2517 = vand.u32 %v68, 4294901760
    %2518 = vmatpush1.msra.mxu0 %v2517
    %2519 = vmatprep.subr.mxu0 0.0
    %v2520 = vand.u32 %v67, 4294901760
    %2521 = vmatpush1.msra.mxu0 %v2520
    %2522 = vmatprep.subr.mxu0 0.0
    %v2523 = vand.u32 %v66, 4294901760
    %2524 = vmatpush1.msra.mxu0 %v2523
    %2525 = vmatprep.subr.mxu0 0.0
    %v2526 = vand.u32 %v65, 4294901760
    %2527 = vmatpush1.msra.mxu0 %v2526
    %2528 = vmatprep.subr.mxu0 0.0
    %v2529 = vand.u32 %v64, 4294901760
    %2530 = vmatpush1.msra.mxu0 %v2529
    %2531 = vmatprep.subr.mxu0 0.0
    %v2532 = vand.u32 %v63, 4294901760
    %2533 = vmatpush1.msra.mxu0 %v2532
    %2534 = vmatprep.subr.mxu0 0.0
    %v2535 = vand.u32 %v62, 4294901760
    %2536 = vmatpush1.msra.mxu0 %v2535
    %2537 = vmatprep.subr.mxu0 0.0
    %2538 = vmatpush2.msra.mxu0 0.0
    %2539 = vmatprep.subr.mxu0 0.0
    %2540 = vmatpush2.msra.mxu0 0.0
    %2541 = vmatprep.subr.mxu0 0.0
    %2542 = vmatpush2.msra.mxu0 0.0
    %2543 = vmatprep.subr.mxu0 0.0
    %2544 = vmatpush2.msra.mxu0 0.0
    %2545 = vmatprep.subr.mxu0 0.0
    %2546 = vmatpush2.msra.mxu0 0.0
    %2547 = vmatprep.subr.mxu0 0.0
    %2548 = vmatpush2.msra.mxu0 0.0
    %2549 = vmatprep.subr.mxu0 0.0
    %2550 = vmatpush2.msra.mxu0 0.0
    %2551 = vmatprep.subr.mxu0 0.0
    %2552 = vmatpush2.msra.mxu0 0.0
    %2553 = vmatprep.subr.mxu0 0.0
    %2554 = vmatpush2.msra.mxu0 0.0
    %2555 = vmatprep.subr.mxu0 0.0
    %2556 = vmatpush2.msra.mxu0 0.0
    %2557 = vmatprep.subr.mxu0 0.0
    %2558 = vmatpush2.msra.mxu0 0.0
    %2559 = vmatprep.subr.mxu0 0.0
    %2560 = vmatpush2.msra.mxu0 0.0
    %2561 = vmatprep.subr.mxu0 0.0
    %2562 = vmatpush2.msra.mxu0 0.0
    %2563 = vmatprep.subr.mxu0 0.0
    %2564 = vmatpush2.msra.mxu0 0.0
    %2565 = vmatprep.subr.mxu0 0.0
    %2566 = vmatpush2.msra.mxu0 0.0
    %2567 = vmatprep.subr.mxu0 0.0
    %2568 = vmatpush2.msra.mxu0 0.0
    %2569 = vmatprep.mubr.f32.mxu0 0.0
    %v2570 = vand.u32 %v1364, 4294901760
    %2571 = vmatmul.mubr.f32.gmra.mxu0 %v2570
    %v2572 = vpop.f32.mrf.mxu0
    %v2573 = vadd.f32 %v2396, %v2572
    %v2574 = vpop.f32.mrf.mxu0
    %2575 = vmatprep.mubr.f32.mxu0 0.0
    %v2576 = vand.u32 %v1365, 4294901760
    %2577 = vmatmul.mubr.f32.gmra.mxu0 %v2576
    %v2578 = vpop.f32.mrf.mxu0
    %v2579 = vadd.f32 %v2402, %v2578
    %v2580 = vpop.f32.mrf.mxu0
    %2581 = vmatprep.mubr.f32.mxu0 0.0
    %v2582 = vand.u32 %v1366, 4294901760
    %2583 = vmatmul.mubr.f32.gmra.mxu0 %v2582
    %v2584 = vpop.f32.mrf.mxu0
    %v2585 = vadd.f32 %v2408, %v2584
    %v2586 = vpop.f32.mrf.mxu0
    %2587 = vmatprep.mubr.f32.mxu0 0.0
    %v2588 = vand.u32 %v1367, 4294901760
    %2589 = vmatmul.mubr.f32.gmra.mxu0 %v2588
    %v2590 = vpop.f32.mrf.mxu0
    %v2591 = vadd.f32 %v2414, %v2590
    %v2592 = vpop.f32.mrf.mxu0
    %2593 = vmatprep.mubr.f32.mxu0 0.0
    %v2594 = vand.u32 %v1368, 4294901760
    %2595 = vmatmul.mubr.f32.gmra.mxu0 %v2594
    %v2596 = vpop.f32.mrf.mxu0
    %v2597 = vadd.f32 %v2420, %v2596
    %v2598 = vpop.f32.mrf.mxu0
    %2599 = vmatprep.mubr.f32.mxu0 0.0
    %v2600 = vand.u32 %v1369, 4294901760
    %2601 = vmatmul.mubr.f32.gmra.mxu0 %v2600
    %v2602 = vpop.f32.mrf.mxu0
    %v2603 = vadd.f32 %v2426, %v2602
    %v2604 = vpop.f32.mrf.mxu0
    %2605 = vmatprep.mubr.f32.mxu0 0.0
    %v2606 = vand.u32 %v1370, 4294901760
    %2607 = vmatmul.mubr.f32.gmra.mxu0 %v2606
    %v2608 = vpop.f32.mrf.mxu0
    %v2609 = vadd.f32 %v2432, %v2608
    %v2610 = vpop.f32.mrf.mxu0
    %2611 = vmatprep.mubr.f32.mxu0 0.0
    %v2612 = vand.u32 %v1371, 4294901760
    %2613 = vmatmul.mubr.f32.gmra.mxu0 %v2612
    %v2614 = vpop.f32.mrf.mxu0
    %v2615 = vadd.f32 %v2438, %v2614
    %v2616 = vpop.f32.mrf.mxu0
    %2617 = vmatprep.mubr.f32.mxu0 0.0
    %v2618 = vand.u32 %v1372, 4294901760
    %2619 = vmatmul.mubr.f32.gmra.mxu0 %v2618
    %v2620 = vpop.f32.mrf.mxu0
    %v2621 = vadd.f32 %v2444, %v2620
    %v2622 = vpop.f32.mrf.mxu0
    %2623 = vmatprep.mubr.f32.mxu0 0.0
    %v2624 = vand.u32 %v1373, 4294901760
    %2625 = vmatmul.mubr.f32.gmra.mxu0 %v2624
    %v2626 = vpop.f32.mrf.mxu0
    %v2627 = vadd.f32 %v2450, %v2626
    %v2628 = vpop.f32.mrf.mxu0
    %2629 = vmatprep.mubr.f32.mxu0 0.0
    %v2630 = vand.u32 %v1374, 4294901760
    %2631 = vmatmul.mubr.f32.gmra.mxu0 %v2630
    %v2632 = vpop.f32.mrf.mxu0
    %v2633 = vadd.f32 %v2456, %v2632
    %v2634 = vpop.f32.mrf.mxu0
    %2635 = vmatprep.mubr.f32.mxu0 0.0
    %v2636 = vand.u32 %v1375, 4294901760
    %2637 = vmatmul.mubr.f32.gmra.mxu0 %v2636
    %v2638 = vpop.f32.mrf.mxu0
    %v2639 = vadd.f32 %v2462, %v2638
    %v2640 = vpop.f32.mrf.mxu0
    %2641 = vmatprep.mubr.f32.mxu0 0.0
    %v2642 = vand.u32 %v1376, 4294901760
    %2643 = vmatmul.mubr.f32.gmra.mxu0 %v2642
    %v2644 = vpop.f32.mrf.mxu0
    %v2645 = vadd.f32 %v2468, %v2644
    %v2646 = vpop.f32.mrf.mxu0
    %2647 = vmatprep.mubr.f32.mxu0 0.0
    %v2648 = vand.u32 %v1377, 4294901760
    %2649 = vmatmul.mubr.f32.gmra.mxu0 %v2648
    %v2650 = vpop.f32.mrf.mxu0
    %v2651 = vadd.f32 %v2474, %v2650
    %v2652 = vpop.f32.mrf.mxu0
    %2653 = vmatprep.mubr.f32.mxu0 0.0
    %v2654 = vand.u32 %v1378, 4294901760
    %2655 = vmatmul.mubr.f32.gmra.mxu0 %v2654
    %v2656 = vpop.f32.mrf.mxu0
    %v2657 = vadd.f32 %v2480, %v2656
    %v2658 = vpop.f32.mrf.mxu0
    %2659 = vmatprep.mubr.f32.mxu0 0.0
    %v2660 = vand.u32 %v1379, 4294901760
    %2661 = vmatmul.mubr.f32.gmra.mxu0 %v2660
    %v2662 = vpop.f32.mrf.mxu0
    %v2663 = vadd.f32 %v2486, %v2662
    %v2664 = vpop.f32.mrf.mxu0
    %2665 = vdwg.mxu0
    %v2666 = vmul.f32 %v1271, 0.03125
    %v2667 = vmul.f32 %v1277, 0.03125
    %v2668 = vmul.f32 %v1283, 0.03125
    %v2669 = vmul.f32 %v1289, 0.03125
    %v2670 = vmul.f32 %v1295, 0.03125
    %v2671 = vmul.f32 %v1301, 0.03125
    %v2672 = vmul.f32 %v1307, 0.03125
    %v2673 = vmul.f32 %v1313, 0.03125
    %v2674 = vmul.f32 %v1319, 0.03125
    %v2675 = vmul.f32 %v1325, 0.03125
    %v2676 = vmul.f32 %v1331, 0.03125
    %v2677 = vmul.f32 %v1337, 0.03125
    %v2678 = vmul.f32 %v1343, 0.03125
    %v2679 = vmul.f32 %v1349, 0.03125
    %v2680 = vmul.f32 %v1355, 0.03125
    %v2681 = vmul.f32 %v1361, 0.03125
    %v2682 = vmul.f32 %v2573, 0.03125
    %v2683 = vmul.f32 %v2579, 0.03125
    %v2684 = vmul.f32 %v2585, 0.03125
    %v2685 = vmul.f32 %v2591, 0.03125
    %v2686 = vmul.f32 %v2597, 0.03125
    %v2687 = vmul.f32 %v2603, 0.03125
    %v2688 = vmul.f32 %v2609, 0.03125
    %v2689 = vmul.f32 %v2615, 0.03125
    %v2690 = vmul.f32 %v2621, 0.03125
    %v2691 = vmul.f32 %v2627, 0.03125
    %v2692 = vmul.f32 %v2633, 0.03125
    %v2693 = vmul.f32 %v2639, 0.03125
    %v2694 = vmul.f32 %v2645, 0.03125
    %v2695 = vmul.f32 %v2651, 0.03125
    %v2696 = vmul.f32 %v2657, 0.03125
    %v2697 = vmul.f32 %v2663, 0.03125
    %v2698 = vmul.f32 %v2666, %v2666
    %v2699 = vmul.f32 %v2667, %v2667
    %v2700 = vmul.f32 %v2668, %v2668
    %v2701 = vmul.f32 %v2669, %v2669
    %v2702 = vmul.f32 %v2670, %v2670
    %v2703 = vmul.f32 %v2671, %v2671
    %v2704 = vmul.f32 %v2672, %v2672
    %v2705 = vmul.f32 %v2673, %v2673
    %v2706 = vmul.f32 %v2674, %v2674
    %v2707 = vmul.f32 %v2675, %v2675
    %v2708 = vmul.f32 %v2676, %v2676
    %v2709 = vmul.f32 %v2677, %v2677
    %v2710 = vmul.f32 %v2678, %v2678
    %v2711 = vmul.f32 %v2679, %v2679
    %v2712 = vmul.f32 %v2680, %v2680
    %v2713 = vmul.f32 %v2681, %v2681
    %v2714 = vsub.f32 %v2682, %v2698
    %v2715 = vsub.f32 %v2683, %v2699
    %v2716 = vsub.f32 %v2684, %v2700
    %v2717 = vsub.f32 %v2685, %v2701
    %v2718 = vsub.f32 %v2686, %v2702
    %v2719 = vsub.f32 %v2687, %v2703
    %v2720 = vsub.f32 %v2688, %v2704
    %v2721 = vsub.f32 %v2689, %v2705
    %v2722 = vsub.f32 %v2690, %v2706
    %v2723 = vsub.f32 %v2691, %v2707
    %v2724 = vsub.f32 %v2692, %v2708
    %v2725 = vsub.f32 %v2693, %v2709
    %v2726 = vsub.f32 %v2694, %v2710
    %v2727 = vsub.f32 %v2695, %v2711
    %v2728 = vsub.f32 %v2696, %v2712
    %v2729 = vsub.f32 %v2697, %v2713
    %v2730 = vadd.f32 %v2714, 1e-05
    %v2731 = vadd.f32 %v2715, 1e-05
    %v2732 = vadd.f32 %v2716, 1e-05
    %v2733 = vadd.f32 %v2717, 1e-05
    %v2734 = vadd.f32 %v2718, 1e-05
    %v2735 = vadd.f32 %v2719, 1e-05
    %v2736 = vadd.f32 %v2720, 1e-05
    %v2737 = vadd.f32 %v2721, 1e-05
    %v2738 = vadd.f32 %v2722, 1e-05
    %v2739 = vadd.f32 %v2723, 1e-05
    %v2740 = vadd.f32 %v2724, 1e-05
    %v2741 = vadd.f32 %v2725, 1e-05
    %v2742 = vadd.f32 %v2726, 1e-05
    %v2743 = vadd.f32 %v2727, 1e-05
    %v2744 = vadd.f32 %v2728, 1e-05
    %v2745 = vadd.f32 %v2729, 1e-05
    %v2746 = vrsqrt.pop %v2730
    %v2747 = vrsqrt.pop %v2731
    %v2748 = vrsqrt.pop %v2732
    %v2749 = vrsqrt.pop %v2733
    %v2750 = vrsqrt.pop %v2734
    %v2751 = vrsqrt.pop %v2735
    %v2752 = vrsqrt.pop %v2736
    %v2753 = vrsqrt.pop %v2737
    %v2754 = vrsqrt.pop %v2738
    %v2755 = vrsqrt.pop %v2739
    %v2756 = vrsqrt.pop %v2740
    %v2757 = vrsqrt.pop %v2741
    %v2758 = vrsqrt.pop %v2742
    %v2759 = vrsqrt.pop %v2743
    %v2760 = vrsqrt.pop %v2744
    %v2761 = vrsqrt.pop %v2745
    %v2762 = vsub.f32 %v46, %v2666
    %v2763 = vsub.f32 %v47, %v2667
    %v2764 = vsub.f32 %v48, %v2668
    %v2765 = vsub.f32 %v49, %v2669
    %v2766 = vsub.f32 %v50, %v2670
    %v2767 = vsub.f32 %v51, %v2671
    %v2768 = vsub.f32 %v52, %v2672
    %v2769 = vsub.f32 %v53, %v2673
    %v2770 = vsub.f32 %v54, %v2674
    %v2771 = vsub.f32 %v55, %v2675
    %v2772 = vsub.f32 %v56, %v2676
    %v2773 = vsub.f32 %v57, %v2677
    %v2774 = vsub.f32 %v58, %v2678
    %v2775 = vsub.f32 %v59, %v2679
    %v2776 = vsub.f32 %v60, %v2680
    %v2777 = vsub.f32 %v61, %v2681
    %v2778 = vmul.f32 %v2762, %v2746
    %v2779 = vmul.f32 %v2763, %v2747
    %v2780 = vmul.f32 %v2764, %v2748
    %v2781 = vmul.f32 %v2765, %v2749
    %v2782 = vmul.f32 %v2766, %v2750
    %v2783 = vmul.f32 %v2767, %v2751
    %v2784 = vmul.f32 %v2768, %v2752
    %v2785 = vmul.f32 %v2769, %v2753
    %v2786 = vmul.f32 %v2770, %v2754
    %v2787 = vmul.f32 %v2771, %v2755
    %v2788 = vmul.f32 %v2772, %v2756
    %v2789 = vmul.f32 %v2773, %v2757
    %v2790 = vmul.f32 %v2774, %v2758
    %v2791 = vmul.f32 %v2775, %v2759
    %v2792 = vmul.f32 %v2776, %v2760
    %v2793 = vmul.f32 %v2777, %v2761
    %v2794 = vld [vmem:[%s2] sm:$0x1]
    %v2796 = vlaneseq
    %v2797 = vshrl.u32 %v2796, 7
    %v2798 = vsub.s32 0, %v2797
    %v2799 = vrot.slane %v2794, %v2798
    %v2801 = vmul.f32 %v2778, %v2799
    %v2802 = vmul.f32 %v2779, %v2799
    %v2803 = vmul.f32 %v2780, %v2799
    %v2804 = vmul.f32 %v2781, %v2799
    %v2805 = vmul.f32 %v2782, %v2799
    %v2806 = vmul.f32 %v2783, %v2799
    %v2807 = vmul.f32 %v2784, %v2799
    %v2808 = vmul.f32 %v2785, %v2799
    %v2809 = vmul.f32 %v2786, %v2799
    %v2810 = vmul.f32 %v2787, %v2799
    %v2811 = vmul.f32 %v2788, %v2799
    %v2812 = vmul.f32 %v2789, %v2799
    %v2813 = vmul.f32 %v2790, %v2799
    %v2814 = vmul.f32 %v2791, %v2799
    %v2815 = vmul.f32 %v2792, %v2799
    %v2816 = vmul.f32 %v2793, %v2799
    %v2817 = vld [vmem:[%s3] sm:$0x1]
    %v2819 = vlaneseq
    %v2820 = vshrl.u32 %v2819, 7
    %v2821 = vsub.s32 0, %v2820
    %v2822 = vrot.slane %v2817, %v2821
    %v2824 = vadd.f32 %v2801, %v2822
    %v2825 = vadd.f32 %v2802, %v2822
    %v2826 = vadd.f32 %v2803, %v2822
    %v2827 = vadd.f32 %v2804, %v2822
    %v2828 = vadd.f32 %v2805, %v2822
    %v2829 = vadd.f32 %v2806, %v2822
    %v2830 = vadd.f32 %v2807, %v2822
    %v2831 = vadd.f32 %v2808, %v2822
    %v2832 = vadd.f32 %v2809, %v2822
    %v2833 = vadd.f32 %v2810, %v2822
    %v2834 = vadd.f32 %v2811, %v2822
    %v2835 = vadd.f32 %v2812, %v2822
    %v2836 = vadd.f32 %v2813, %v2822
    %v2837 = vadd.f32 %v2814, %v2822
    %v2838 = vadd.f32 %v2815, %v2822
    %v2839 = vadd.f32 %v2816, %v2822
    %2840 = vst [vmem:[#allocation7] sm:$0xff] %v2824
    %2841 = vst [vmem:[#allocation7 + $0x8] sm:$0xff] %v2825
    %2842 = vst [vmem:[#allocation7 + $0x10] sm:$0xff] %v2826
    %2843 = vst [vmem:[#allocation7 + $0x18] sm:$0xff] %v2827
    %2844 = vst [vmem:[#allocation7 + $0x20] sm:$0xff] %v2828
    %2845 = vst [vmem:[#allocation7 + $0x28] sm:$0xff] %v2829
    %2846 = vst [vmem:[#allocation7 + $0x30] sm:$0xff] %v2830
    %2847 = vst [vmem:[#allocation7 + $0x38] sm:$0xff] %v2831
    %2848 = vst [vmem:[#allocation7 + $0x40] sm:$0xff] %v2832
    %2849 = vst [vmem:[#allocation7 + $0x48] sm:$0xff] %v2833
    %2850 = vst [vmem:[#allocation7 + $0x50] sm:$0xff] %v2834
    %2851 = vst [vmem:[#allocation7 + $0x58] sm:$0xff] %v2835
    %2852 = vst [vmem:[#allocation7 + $0x60] sm:$0xff] %v2836
    %2853 = vst [vmem:[#allocation7 + $0x68] sm:$0xff] %v2837
    %2854 = vst [vmem:[#allocation7 + $0x70] sm:$0xff] %v2838
    %2855 = vst [vmem:[#allocation7 + $0x78] sm:$0xff] %v2839
    // Predicated region
    $region26: #{tpu_custom_call.1} parent=1 // pred_check
      _
    $region27: #{tpu_custom_call.1} parent=1 // pred_check_branch
      %2857 = sbr.rel (0) target = $region29
    $region28: #{tpu_custom_call.1} parent=1 // pred_region
      %s2859 = ssub.s32 2048, 2048
      %2860 = vsyncadd [#allocation4], %s2859
      %s2861 = sshll.u32 [#allocation7], 4
      %s2862 = int_to_ptr.vmem [resolvable:$true] %s2861
      %2867 = dma.vmem_to_hbm [thread:$0]  %s2862, 2048, %s4, [#allocation4], 128, 128, 8
    $region29: #{tpu_custom_call.1} parent=1 // pred_fallthru
      _
    // Predicated region
    $region30: #{tpu_custom_call.1} parent=1 // pred_check
      _
    $region31: #{tpu_custom_call.1} parent=1 // pred_check_branch
      %2869 = sbr.rel (0) target = $region33
    $region32: #{tpu_custom_call.1} parent=1 // pred_region
      %2870 = dma.done [#allocation4], 2048
    $region33: #{tpu_custom_call.1} parent=1 // pred_fallthru
      _
    %2871 = vsyncpa [#allocation3], 1
    %2872 = vsyncpa [#allocation6], 1
    %2873 = vsyncpa [#allocation4], 1

</llo_original>
